<compile_context>
chip_gen: v7x
topology: tpu7x:2x2x1
jax: 0.10.0
libtpu: 0.0.40
codegen_flags: <defaults>
</compile_context>

<pallas_src>
import functools

import jax
import jax.numpy as jnp
from jax.experimental import pallas as pl
from jax.experimental.pallas import tpu as pltpu

K_IN = 28 * 28    # 784 (784 % 16 == 0 -> bf16 sublane-aligned, no K pad needed)
H = 512
N_OUT = 10
N_PAD = 128       # lane-dense output width (unmasked vst); wrapper slices [:, :10]

GRANULE = 8        # f32 sublane granule for the x / out M-tiles
TB_MAX = 512       # big tiles amortize per-grid-step pipeline overhead (~600 cyc)
MIN_SPLIT_ROWS = 64  # don't force a multi-step grid for tiny batches


def mlp_kernel(x_ref, w1_ref, b1_ref, w2_ref, b2_ref, w3_ref, b3_ref, out_ref):
    # x_ref: (TB, 784) f32; w* bf16 (in, out); b* f32 (1, out); out (TB, 128) f32.
    x = x_ref[...].astype(jnp.bfloat16)                # in-kernel cast, hidden under MXU
    h1 = jnp.dot(x, w1_ref[...], preferred_element_type=jnp.float32) + b1_ref[...]
    h1 = jnp.maximum(h1, 0.0).astype(jnp.bfloat16)     # ReLU in f32, next MXU op in bf16
    h2 = jnp.dot(h1, w2_ref[...], preferred_element_type=jnp.float32) + b2_ref[...]
    h2 = jnp.maximum(h2, 0.0).astype(jnp.bfloat16)
    logits = jnp.dot(h2, w3_ref[...], preferred_element_type=jnp.float32) + b3_ref[...]
    out_ref[...] = logits.astype(out_ref.dtype)


def _round_up(x, m):
    return (x + m - 1) // m * m


def _cdiv(a, b):
    return -(-a // b)


def _choose_tiling(B):
    """Pick (TB, B_pad, n_tiles): big tiles, adaptive padding, >=2 even grid steps
    when the batch is large enough (so v7x's 2 TensorCores both get work)."""
    B_gran = _round_up(B, GRANULE)
    n_tiles = _cdiv(B_gran, TB_MAX)
    if n_tiles < 2 and B_gran >= MIN_SPLIT_ROWS:
        n_tiles = 2                         # megacore: give both TCs a tile
    if n_tiles > 1 and n_tiles % 2:
        n_tiles += 1                        # even grid -> no 2-TC tail imbalance
    TB = _round_up(_cdiv(B_gran, n_tiles), GRANULE)
    return TB, TB * n_tiles, n_tiles


def prepare_params(params):
    """One-time parameter preprocessing (hoisted out of the per-call forward):
    bf16 weight copies, w3/b3 zero-padded to the lane-dense N=128 output width."""
    w1, b1, w2, b2, w3, b3 = params
    w1b = w1.astype(jnp.bfloat16)                                               # (784, 512)
    w2b = w2.astype(jnp.bfloat16)                                               # (512, 512)
    w3b = jnp.pad(w3.astype(jnp.bfloat16), ((0, 0), (0, N_PAD - w3.shape[1])))  # (512, 128)
    b3p = jnp.pad(b3, ((0, 0), (0, N_PAD - b3.shape[1])))                       # (1, 128)
    return (w1b, b1, w2b, b2, w3b, b3p)


@jax.jit
def neural_network_forward(x_nchw, prepared_params):
    """x_nchw: (B, 1, 28, 28) float32. Returns logits (B, 10) float32."""
    w1b, b1, w2b, b2, w3b, b3p = prepared_params
    B = x_nchw.shape[0]

    # nn.Flatten(): row-major flatten of everything after the batch dim (free reshape).
    x_flat = x_nchw.reshape(B, K_IN)                   # (B, 784) f32

    TB, B_pad, n_tiles = _choose_tiling(B)
    if B_pad != B:
        x_flat = jnp.pad(x_flat, ((0, B_pad - B), (0, 0)))

    tiled = lambda shape: pl.BlockSpec(shape, lambda i: (i, 0))
    # Same block index every grid step -> Pallas keeps weights/biases resident (one DMA).
    resident = lambda shape: pl.BlockSpec(shape, lambda i: (0, 0))

    flops = 2 * B_pad * (K_IN * H + H * H + H * N_PAD)
    bytes_accessed = (
        x_flat.size * 4
        + w1b.size * 2 + w2b.size * 2 + w3b.size * 2
        + b1.size * 4 + b2.size * 4 + b3p.size * 4
        + B_pad * N_PAD * 4
    )

    out = pl.pallas_call(
        mlp_kernel,
        out_shape=jax.ShapeDtypeStruct((B_pad, N_PAD), jnp.float32),
        grid=(n_tiles,),
        in_specs=[
            tiled((TB, K_IN)),
            resident(w1b.shape), resident(b1.shape),
            resident(w2b.shape), resident(b2.shape),
            resident(w3b.shape), resident(b3p.shape),
        ],
        out_specs=tiled((TB, N_PAD)),
        compiler_params=pltpu.CompilerParams(dimension_semantics=("parallel",)),
        cost_estimate=pl.CostEstimate(
            flops=flops, transcendentals=0, bytes_accessed=bytes_accessed),
    )(x_flat, w1b, b1, w2b, b2, w3b, b3p)

    # Slice stays inside the same jit -> fuses, no standalone 128->10 copy pass.
    return out[:B, :N_OUT]


def init_params(key):
    """Deterministic parameter init (Kaiming-uniform-like, as in nn.Linear). f32 masters."""
    def linear(key, fan_in, fan_out):
        kw, kb = jax.random.split(key)
        bound = 1.0 / jnp.sqrt(fan_in)
        # stored as (in, out) so the kernel does x @ W
        w = jax.random.uniform(kw, (fan_in, fan_out), jnp.float32, -bound, bound)
        b = jax.random.uniform(kb, (1, fan_out), jnp.float32, -bound, bound)
        return w, b

    k1, k2, k3 = jax.random.split(key, 3)
    w1, b1 = linear(k1, K_IN, H)
    w2, b2 = linear(k2, H, H)
    w3, b3 = linear(k3, H, N_OUT)
    return (w1, b1, w2, b2, w3, b3)


def reference_forward(x_nchw, params):
    """Pure-JAX reference using the same bf16-operand / f32-accumulate numerics."""
    w1, b1, w2, b2, w3, b3 = params
    bf = jnp.bfloat16
    x = x_nchw.reshape(x_nchw.shape[0], -1).astype(bf)
    h1 = jnp.maximum(
        jnp.dot(x, w1.astype(bf), preferred_element_type=jnp.float32) + b1, 0.0).astype(bf)
    h2 = jnp.maximum(
        jnp.dot(h1, w2.astype(bf), preferred_element_type=jnp.float32) + b2, 0.0).astype(bf)
    return jnp.dot(h2, w3.astype(bf), preferred_element_type=jnp.float32) + b3


if __name__ == "__main__":
    key = jax.random.PRNGKey(0)
    kx, kp = jax.random.split(key)

    B = 2
    # Input analogous to a batch of 28x28 single-channel images, NCHW (like PyTorch).
    x = jax.random.uniform(kx, (B, 1, 28, 28), jnp.float32)
    params = init_params(kp)
    prepared = prepare_params(params)          # one-time weight prep (bf16 cast + N pad)

    logits = neural_network_forward(x, prepared)
    logits = jax.block_until_ready(logits)

    ref = reference_forward(x, params)
    assert logits.shape == (B, N_OUT)
    assert jnp.allclose(logits, ref, atol=1e-2, rtol=1e-2), "mismatch vs reference"

    print("KERNEL_OK")
</pallas_src>

<mosaic_0001>
module attributes {stable_mosaic.version = 11 : i64} {
  func.func @mlp_kernel(%arg0: i32, %arg1: memref<8x784xf32, #tpu.memory_space<vmem>>, %arg2: memref<784x512xbf16, #tpu.memory_space<vmem>>, %arg3: memref<1x512xf32, #tpu.memory_space<vmem>>, %arg4: memref<512x512xbf16, #tpu.memory_space<vmem>>, %arg5: memref<1x512xf32, #tpu.memory_space<vmem>>, %arg6: memref<512x128xbf16, #tpu.memory_space<vmem>>, %arg7: memref<1x128xf32, #tpu.memory_space<vmem>>, %arg8: memref<8x128xf32, #tpu.memory_space<vmem>>) attributes {dimension_semantics = [#tpu.dimension_semantics<parallel>], iteration_bounds = array<i64: 1>, scalar_prefetch = 0 : i64, scratch_operands = 0 : i64, tpu.core_type = #tpu.core_type<tc>, window_params = [{transform_indices = @transform_0, window_bounds = array<i64: 8, 784>}, {pipeline_mode = #tpu.pipeline_mode<synchronous>, transform_indices = @transform_1, window_bounds = array<i64: 784, 512>}, {pipeline_mode = #tpu.pipeline_mode<synchronous>, transform_indices = @transform_2, window_bounds = array<i64: 1, 512>}, {pipeline_mode = #tpu.pipeline_mode<synchronous>, transform_indices = @transform_3, window_bounds = array<i64: 512, 512>}, {pipeline_mode = #tpu.pipeline_mode<synchronous>, transform_indices = @transform_4, window_bounds = array<i64: 1, 512>}, {pipeline_mode = #tpu.pipeline_mode<synchronous>, transform_indices = @transform_5, window_bounds = array<i64: 512, 128>}, {pipeline_mode = #tpu.pipeline_mode<synchronous>, transform_indices = @transform_6, window_bounds = array<i64: 1, 128>}, {transform_indices = @transform_7, window_bounds = array<i64: 8, 128>}]} {
    %c0 = arith.constant 0 : index
    %c0_0 = arith.constant 0 : index
    %0 = vector.load %arg1[%c0, %c0_0] : memref<8x784xf32, #tpu.memory_space<vmem>>, vector<8x784xf32>
    %1 = arith.truncf %0 : vector<8x784xf32> to vector<8x784xbf16>
    %c0_1 = arith.constant 0 : index
    %c0_2 = arith.constant 0 : index
    %2 = vector.load %arg2[%c0_1, %c0_2] : memref<784x512xbf16, #tpu.memory_space<vmem>>, vector<784x512xbf16>
    %cst = arith.constant dense<0.000000e+00> : vector<8x512xf32>
    %3 = tpu.matmul %1, %2, %cst {dimension_numbers = #tpu.dot_dimension_numbers<[1], [0], [0], [1], [0, 0, 1, 1], [], []>} : vector<8x784xbf16>, vector<784x512xbf16>, vector<8x512xf32> -> vector<8x512xf32>
    %c0_3 = arith.constant 0 : index
    %c0_4 = arith.constant 0 : index
    %4 = vector.load %arg3[%c0_3, %c0_4] : memref<1x512xf32, #tpu.memory_space<vmem>>, vector<1x512xf32>
    %5 = vector.broadcast %4 : vector<1x512xf32> to vector<8x512xf32>
    %6 = arith.addf %3, %5 : vector<8x512xf32>
    %cst_5 = arith.constant 0.000000e+00 : f32
    %7 = vector.broadcast %cst_5 : f32 to vector<8x512xf32>
    %8 = arith.maximumf %6, %7 : vector<8x512xf32>
    %9 = arith.truncf %8 : vector<8x512xf32> to vector<8x512xbf16>
    %c0_6 = arith.constant 0 : index
    %c0_7 = arith.constant 0 : index
    %10 = vector.load %arg4[%c0_6, %c0_7] : memref<512x512xbf16, #tpu.memory_space<vmem>>, vector<512x512xbf16>
    %cst_8 = arith.constant dense<0.000000e+00> : vector<8x512xf32>
    %11 = tpu.matmul %9, %10, %cst_8 {dimension_numbers = #tpu.dot_dimension_numbers<[1], [0], [0], [1], [0, 0, 1, 1], [], []>} : vector<8x512xbf16>, vector<512x512xbf16>, vector<8x512xf32> -> vector<8x512xf32>
    %c0_9 = arith.constant 0 : index
    %c0_10 = arith.constant 0 : index
    %12 = vector.load %arg5[%c0_9, %c0_10] : memref<1x512xf32, #tpu.memory_space<vmem>>, vector<1x512xf32>
    %13 = vector.broadcast %12 : vector<1x512xf32> to vector<8x512xf32>
    %14 = arith.addf %11, %13 : vector<8x512xf32>
    %cst_11 = arith.constant 0.000000e+00 : f32
    %15 = vector.broadcast %cst_11 : f32 to vector<8x512xf32>
    %16 = arith.maximumf %14, %15 : vector<8x512xf32>
    %17 = arith.truncf %16 : vector<8x512xf32> to vector<8x512xbf16>
    %c0_12 = arith.constant 0 : index
    %c0_13 = arith.constant 0 : index
    %18 = vector.load %arg6[%c0_12, %c0_13] : memref<512x128xbf16, #tpu.memory_space<vmem>>, vector<512x128xbf16>
    %cst_14 = arith.constant dense<0.000000e+00> : vector<8x128xf32>
    %19 = tpu.matmul %17, %18, %cst_14 {dimension_numbers = #tpu.dot_dimension_numbers<[1], [0], [0], [1], [0, 0, 1, 1], [], []>} : vector<8x512xbf16>, vector<512x128xbf16>, vector<8x128xf32> -> vector<8x128xf32>
    %c0_15 = arith.constant 0 : index
    %c0_16 = arith.constant 0 : index
    %20 = vector.load %arg7[%c0_15, %c0_16] : memref<1x128xf32, #tpu.memory_space<vmem>>, vector<1x128xf32>
    %21 = vector.broadcast %20 : vector<1x128xf32> to vector<8x128xf32>
    %22 = arith.addf %19, %21 : vector<8x128xf32>
    %c0_17 = arith.constant 0 : index
    %c0_18 = arith.constant 0 : index
    %23 = vector.load %arg8[%c0_17, %c0_18] : memref<8x128xf32, #tpu.memory_space<vmem>>, vector<8x128xf32>
    tpu.vector_store %arg8[%c0_17, %c0_18], %22 {strides = array<i32>} : memref<8x128xf32, #tpu.memory_space<vmem>>, vector<8x128xf32>,
    return
  }
  func.func @transform_0(%arg0: i32) -> (i32, i32) {
    %c0_i32 = arith.constant 0 : i32
    %c0_i32_0 = arith.constant 0 : i32
    return %arg0, %c0_i32 : i32, i32
  }
  func.func @transform_1(%arg0: i32) -> (i32, i32) {
    %c0_i32 = arith.constant 0 : i32
    %c0_i32_0 = arith.constant 0 : i32
    %c0_i32_1 = arith.constant 0 : i32
    return %c0_i32, %c0_i32_0 : i32, i32
  }
  func.func @transform_2(%arg0: i32) -> (i32, i32) {
    %c0_i32 = arith.constant 0 : i32
    %c0_i32_0 = arith.constant 0 : i32
    %c0_i32_1 = arith.constant 0 : i32
    return %c0_i32, %c0_i32_0 : i32, i32
  }
  func.func @transform_3(%arg0: i32) -> (i32, i32) {
    %c0_i32 = arith.constant 0 : i32
    %c0_i32_0 = arith.constant 0 : i32
    %c0_i32_1 = arith.constant 0 : i32
    return %c0_i32, %c0_i32_0 : i32, i32
  }
  func.func @transform_4(%arg0: i32) -> (i32, i32) {
    %c0_i32 = arith.constant 0 : i32
    %c0_i32_0 = arith.constant 0 : i32
    %c0_i32_1 = arith.constant 0 : i32
    return %c0_i32, %c0_i32_0 : i32, i32
  }
  func.func @transform_5(%arg0: i32) -> (i32, i32) {
    %c0_i32 = arith.constant 0 : i32
    %c0_i32_0 = arith.constant 0 : i32
    %c0_i32_1 = arith.constant 0 : i32
    return %c0_i32, %c0_i32_0 : i32, i32
  }
  func.func @transform_6(%arg0: i32) -> (i32, i32) {
    %c0_i32 = arith.constant 0 : i32
    %c0_i32_0 = arith.constant 0 : i32
    %c0_i32_1 = arith.constant 0 : i32
    return %c0_i32, %c0_i32_0 : i32, i32
  }
  func.func @transform_7(%arg0: i32) -> (i32, i32) {
    %c0_i32 = arith.constant 0 : i32
    %c0_i32_0 = arith.constant 0 : i32
    return %arg0, %c0_i32 : i32, i32
  }
}

</mosaic_0001>

<llo_original>
// kernel: neural_network_forward.1
$region0: #{neural_network_forward.1}
  #allocation0 [shape = 'u32[]', space=smem, size = 0x4, offset = 0x4, fixed_abs, tag = 'smem constant byte address 0x4 - core index']
  #allocation1 [shape = 'u32[144,128]{1,0:T(1,128)}', space=vmem, size = 0x12000, scoped, tag = 'internal scratch']
  %s0 = inlined_call_operand.vmem [shape: f32[8,784], index: 0, kind: input, shape index: {}]
  %s1 = inlined_call_operand.hbm [shape: bf16[784,512], index: 1, kind: input, shape index: {}]
  %s2 = inlined_call_operand.vmem [shape: f32[1,512], index: 2, kind: input, shape index: {}]
  %s3 = inlined_call_operand.hbm [shape: bf16[512,512], index: 3, kind: input, shape index: {}]
  %s4 = inlined_call_operand.vmem [shape: f32[1,512], index: 4, kind: input, shape index: {}]
  %s5 = inlined_call_operand.vmem [shape: bf16[512,128], index: 5, kind: input, shape index: {}]
  %s6 = inlined_call_operand.vmem [shape: f32[1,128], index: 6, kind: input, shape index: {}]
  %s7 = inlined_call_operand.vmem [shape: f32[8,128], index: 7, kind: output, shape index: {}]
  %s8 = sld [smem:[#allocation0]]
  $region46: #{neural_network_forward.1} parent=0
    _
  %s10 = ssub.s32 1, %s8
  %s11 = scalar_select 0, %s10, %s8
  $region1: #{neural_network_forward.1} parent=0
    #allocation2 [shape = 'u8[802816]{0}', space=vmem, size = 0xc4000, scoped, tag = 'input window, operand 1, single buffered']
    #allocation3 [shape = 's32[1]{0}', space=sflag, size = 0x4, scoped, tag = 'scoped memory for neural_network_forward.1']
    #allocation4 [shape = 'u8[524288]{0}', space=vmem, size = 0x80000, scoped, tag = 'input window, operand 3, single buffered']
    #allocation5 [shape = 's32[1]{0}', space=sflag, size = 0x4, scoped, tag = 'scoped memory for neural_network_forward.1']
    %12 = vsyncpa [#allocation3], 0
    %13 = vsyncpa [#allocation5], 0
    // Predicated region
    $region2: #{neural_network_forward.1} parent=1 // pred_check
      _
    $region3: #{neural_network_forward.1} parent=1 // pred_check_branch
      %15 = sbr.rel (0) target = $region5
    $region4: #{neural_network_forward.1} parent=1 // pred_region
      _
    $region5: #{neural_network_forward.1} parent=1 // pred_fallthru
      _
    // Predicated region
    $region6: #{neural_network_forward.1} parent=1 // pred_check
      _
    $region7: #{neural_network_forward.1} parent=1 // pred_check_branch
      %17 = sbr.rel (0) target = $region9
    $region8: #{neural_network_forward.1} parent=1 // pred_region
      %s19 = ssub.s32 25088, 25088
      %20 = vsyncadd [#allocation3], %s19
      %s21 = sshll.u32 [#allocation2], 4
      %s22 = int_to_ptr.vmem [resolvable:$true] %s21
      %27 = dma.hbm_to_vmem [thread:$0]  %s1, 25088, %s22, [#allocation3], 256, 256, 16
    $region9: #{neural_network_forward.1} parent=1 // pred_fallthru
      _
    // Predicated region
    $region10: #{neural_network_forward.1} parent=1 // pred_check
      _
    $region11: #{neural_network_forward.1} parent=1 // pred_check_branch
      %29 = sbr.rel (0) target = $region13
    $region12: #{neural_network_forward.1} parent=1 // pred_region
      _
    $region13: #{neural_network_forward.1} parent=1 // pred_fallthru
      _
    // Predicated region
    $region14: #{neural_network_forward.1} parent=1 // pred_check
      _
    $region15: #{neural_network_forward.1} parent=1 // pred_check_branch
      %31 = sbr.rel (0) target = $region17
    $region16: #{neural_network_forward.1} parent=1 // pred_region
      %s33 = ssub.s32 16384, 16384
      %34 = vsyncadd [#allocation5], %s33
      %s35 = sshll.u32 [#allocation4], 4
      %s36 = int_to_ptr.vmem [resolvable:$true] %s35
      %41 = dma.hbm_to_vmem [thread:$0]  %s3, 16384, %s36, [#allocation5], 256, 256, 16
    $region17: #{neural_network_forward.1} parent=1 // pred_fallthru
      _
    // Predicated region
    $region18: #{neural_network_forward.1} parent=1 // pred_check
      _
    $region19: #{neural_network_forward.1} parent=1 // pred_check_branch
      %43 = sbr.rel (0) target = $region21
    $region20: #{neural_network_forward.1} parent=1 // pred_region
      _
    $region21: #{neural_network_forward.1} parent=1 // pred_fallthru
      _
    // Predicated region
    $region22: #{neural_network_forward.1} parent=1 // pred_check
      _
    $region23: #{neural_network_forward.1} parent=1 // pred_check_branch
      %45 = sbr.rel (0) target = $region25
    $region24: #{neural_network_forward.1} parent=1 // pred_region
      _
    $region25: #{neural_network_forward.1} parent=1 // pred_fallthru
      _
    // Predicated region
    $region26: #{neural_network_forward.1} parent=1 // pred_check
      _
    $region27: #{neural_network_forward.1} parent=1 // pred_check_branch
      %47 = sbr.rel (0) target = $region29
    $region28: #{neural_network_forward.1} parent=1 // pred_region
      _
    $region29: #{neural_network_forward.1} parent=1 // pred_fallthru
      _
    // Predicated region
    $region30: #{neural_network_forward.1} parent=1 // pred_check
      _
    $region31: #{neural_network_forward.1} parent=1 // pred_check_branch
      %49 = sbr.rel (0) target = $region33
    $region32: #{neural_network_forward.1} parent=1 // pred_region
      %50 = dma.done [#allocation3], 25088
    $region33: #{neural_network_forward.1} parent=1 // pred_fallthru
      _
    // Predicated region
    $region34: #{neural_network_forward.1} parent=1 // pred_check
      _
    $region35: #{neural_network_forward.1} parent=1 // pred_check_branch
      %52 = sbr.rel (0) target = $region37
    $region36: #{neural_network_forward.1} parent=1 // pred_region
      %53 = dma.done [#allocation5], 16384
    $region37: #{neural_network_forward.1} parent=1 // pred_fallthru
      _
    %v55 = vld [vmem:[%s0] sm:$0xff]
    %v56 = vld [vmem:[%s0 + $0x8] sm:$0xff]
    %v57 = vld [vmem:[%s0 + $0x10] sm:$0xff]
    %v58 = vld [vmem:[%s0 + $0x18] sm:$0xff]
    %v59 = vld [vmem:[%s0 + $0x20] sm:$0xff]
    %v60 = vld [vmem:[%s0 + $0x28] sm:$0xff]
    %v61 = vld [vmem:[%s0 + $0x30] sm:$0xff]
    %v62 = vpack.c.bf16 %v55, %v55
    %v63 = vpack.c.bf16 %v56, %v56
    %v64 = vpack.c.bf16 %v57, %v57
    %v65 = vpack.c.bf16 %v58, %v58
    %v66 = vpack.c.bf16 %v59, %v59
    %v67 = vpack.c.bf16 %v60, %v60
    %v68 = vpack.c.bf16 %v61, %v61
    %v69 = vld [vmem:[#allocation2] sm:$0xff]
    %v70 = vld [vmem:[#allocation2 + $0x8] sm:$0xff]
    %v71 = vld [vmem:[#allocation2 + $0x10] sm:$0xff]
    %v72 = vld [vmem:[#allocation2 + $0x18] sm:$0xff]
    %v73 = vld [vmem:[#allocation2 + $0x20] sm:$0xff]
    %v74 = vld [vmem:[#allocation2 + $0x28] sm:$0xff]
    %v75 = vld [vmem:[#allocation2 + $0x30] sm:$0xff]
    %v76 = vld [vmem:[#allocation2 + $0x38] sm:$0xff]
    %v77 = vld [vmem:[#allocation2 + $0x40] sm:$0xff]
    %v78 = vld [vmem:[#allocation2 + $0x48] sm:$0xff]
    %v79 = vld [vmem:[#allocation2 + $0x50] sm:$0xff]
    %v80 = vld [vmem:[#allocation2 + $0x58] sm:$0xff]
    %v81 = vld [vmem:[#allocation2 + $0x60] sm:$0xff]
    %v82 = vld [vmem:[#allocation2 + $0x68] sm:$0xff]
    %v83 = vld [vmem:[#allocation2 + $0x70] sm:$0xff]
    %v84 = vld [vmem:[#allocation2 + $0x78] sm:$0xff]
    %v85 = vld [vmem:[#allocation2 + $0x80] sm:$0xff]
    %v86 = vld [vmem:[#allocation2 + $0x88] sm:$0xff]
    %v87 = vld [vmem:[#allocation2 + $0x90] sm:$0xff]
    %v88 = vld [vmem:[#allocation2 + $0x98] sm:$0xff]
    %v89 = vld [vmem:[#allocation2 + $0xa0] sm:$0xff]
    %v90 = vld [vmem:[#allocation2 + $0xa8] sm:$0xff]
    %v91 = vld [vmem:[#allocation2 + $0xb0] sm:$0xff]
    %v92 = vld [vmem:[#allocation2 + $0xb8] sm:$0xff]
    %v93 = vld [vmem:[#allocation2 + $0xc0] sm:$0xff]
    %v94 = vld [vmem:[#allocation2 + $0xc8] sm:$0xff]
    %v95 = vld [vmem:[#allocation2 + $0xd0] sm:$0xff]
    %v96 = vld [vmem:[#allocation2 + $0xd8] sm:$0xff]
    %v97 = vld [vmem:[#allocation2 + $0xe0] sm:$0xff]
    %v98 = vld [vmem:[#allocation2 + $0xe8] sm:$0xff]
    %v99 = vld [vmem:[#allocation2 + $0xf0] sm:$0xff]
    %v100 = vld [vmem:[#allocation2 + $0xf8] sm:$0xff]
    %v101 = vld [vmem:[#allocation2 + $0x100] sm:$0xff]
    %v102 = vld [vmem:[#allocation2 + $0x108] sm:$0xff]
    %v103 = vld [vmem:[#allocation2 + $0x110] sm:$0xff]
    %v104 = vld [vmem:[#allocation2 + $0x118] sm:$0xff]
    %v105 = vld [vmem:[#allocation2 + $0x120] sm:$0xff]
    %v106 = vld [vmem:[#allocation2 + $0x128] sm:$0xff]
    %v107 = vld [vmem:[#allocation2 + $0x130] sm:$0xff]
    %v108 = vld [vmem:[#allocation2 + $0x138] sm:$0xff]
    %v109 = vld [vmem:[#allocation2 + $0x140] sm:$0xff]
    %v110 = vld [vmem:[#allocation2 + $0x148] sm:$0xff]
    %v111 = vld [vmem:[#allocation2 + $0x150] sm:$0xff]
    %v112 = vld [vmem:[#allocation2 + $0x158] sm:$0xff]
    %v113 = vld [vmem:[#allocation2 + $0x160] sm:$0xff]
    %v114 = vld [vmem:[#allocation2 + $0x168] sm:$0xff]
    %v115 = vld [vmem:[#allocation2 + $0x170] sm:$0xff]
    %v116 = vld [vmem:[#allocation2 + $0x178] sm:$0xff]
    %v117 = vld [vmem:[#allocation2 + $0x180] sm:$0xff]
    %v118 = vld [vmem:[#allocation2 + $0x188] sm:$0xff]
    %v119 = vld [vmem:[#allocation2 + $0x190] sm:$0xff]
    %v120 = vld [vmem:[#allocation2 + $0x198] sm:$0xff]
    %v121 = vld [vmem:[#allocation2 + $0x1a0] sm:$0xff]
    %v122 = vld [vmem:[#allocation2 + $0x1a8] sm:$0xff]
    %v123 = vld [vmem:[#allocation2 + $0x1b0] sm:$0xff]
    %v124 = vld [vmem:[#allocation2 + $0x1b8] sm:$0xff]
    %v125 = vld [vmem:[#allocation2 + $0x1c0] sm:$0xff]
    %v126 = vld [vmem:[#allocation2 + $0x1c8] sm:$0xff]
    %v127 = vld [vmem:[#allocation2 + $0x1d0] sm:$0xff]
    %v128 = vld [vmem:[#allocation2 + $0x1d8] sm:$0xff]
    %v129 = vld [vmem:[#allocation2 + $0x1e0] sm:$0xff]
    %v130 = vld [vmem:[#allocation2 + $0x1e8] sm:$0xff]
    %v131 = vld [vmem:[#allocation2 + $0x1f0] sm:$0xff]
    %v132 = vld [vmem:[#allocation2 + $0x1f8] sm:$0xff]
    %v133 = vld [vmem:[#allocation2 + $0x200] sm:$0xff]
    %v134 = vld [vmem:[#allocation2 + $0x208] sm:$0xff]
    %v135 = vld [vmem:[#allocation2 + $0x210] sm:$0xff]
    %v136 = vld [vmem:[#allocation2 + $0x218] sm:$0xff]
    %v137 = vld [vmem:[#allocation2 + $0x220] sm:$0xff]
    %v138 = vld [vmem:[#allocation2 + $0x228] sm:$0xff]
    %v139 = vld [vmem:[#allocation2 + $0x230] sm:$0xff]
    %v140 = vld [vmem:[#allocation2 + $0x238] sm:$0xff]
    %v141 = vld [vmem:[#allocation2 + $0x240] sm:$0xff]
    %v142 = vld [vmem:[#allocation2 + $0x248] sm:$0xff]
    %v143 = vld [vmem:[#allocation2 + $0x250] sm:$0xff]
    %v144 = vld [vmem:[#allocation2 + $0x258] sm:$0xff]
    %v145 = vld [vmem:[#allocation2 + $0x260] sm:$0xff]
    %v146 = vld [vmem:[#allocation2 + $0x268] sm:$0xff]
    %v147 = vld [vmem:[#allocation2 + $0x270] sm:$0xff]
    %v148 = vld [vmem:[#allocation2 + $0x278] sm:$0xff]
    %v149 = vld [vmem:[#allocation2 + $0x280] sm:$0xff]
    %v150 = vld [vmem:[#allocation2 + $0x288] sm:$0xff]
    %v151 = vld [vmem:[#allocation2 + $0x290] sm:$0xff]
    %v152 = vld [vmem:[#allocation2 + $0x298] sm:$0xff]
    %v153 = vld [vmem:[#allocation2 + $0x2a0] sm:$0xff]
    %v154 = vld [vmem:[#allocation2 + $0x2a8] sm:$0xff]
    %v155 = vld [vmem:[#allocation2 + $0x2b0] sm:$0xff]
    %v156 = vld [vmem:[#allocation2 + $0x2b8] sm:$0xff]
    %v157 = vld [vmem:[#allocation2 + $0x2c0] sm:$0xff]
    %v158 = vld [vmem:[#allocation2 + $0x2c8] sm:$0xff]
    %v159 = vld [vmem:[#allocation2 + $0x2d0] sm:$0xff]
    %v160 = vld [vmem:[#allocation2 + $0x2d8] sm:$0xff]
    %v161 = vld [vmem:[#allocation2 + $0x2e0] sm:$0xff]
    %v162 = vld [vmem:[#allocation2 + $0x2e8] sm:$0xff]
    %v163 = vld [vmem:[#allocation2 + $0x2f0] sm:$0xff]
    %v164 = vld [vmem:[#allocation2 + $0x2f8] sm:$0xff]
    %v165 = vld [vmem:[#allocation2 + $0x300] sm:$0xff]
    %v166 = vld [vmem:[#allocation2 + $0x308] sm:$0xff]
    %v167 = vld [vmem:[#allocation2 + $0x310] sm:$0xff]
    %v168 = vld [vmem:[#allocation2 + $0x318] sm:$0xff]
    %v169 = vld [vmem:[#allocation2 + $0x320] sm:$0xff]
    %v170 = vld [vmem:[#allocation2 + $0x328] sm:$0xff]
    %v171 = vld [vmem:[#allocation2 + $0x330] sm:$0xff]
    %v172 = vld [vmem:[#allocation2 + $0x338] sm:$0xff]
    %v173 = vld [vmem:[#allocation2 + $0x340] sm:$0xff]
    %v174 = vld [vmem:[#allocation2 + $0x348] sm:$0xff]
    %v175 = vld [vmem:[#allocation2 + $0x350] sm:$0xff]
    %v176 = vld [vmem:[#allocation2 + $0x358] sm:$0xff]
    %v177 = vld [vmem:[#allocation2 + $0x360] sm:$0xff]
    %v178 = vld [vmem:[#allocation2 + $0x368] sm:$0xff]
    %v179 = vld [vmem:[#allocation2 + $0x370] sm:$0xff]
    %v180 = vld [vmem:[#allocation2 + $0x378] sm:$0xff]
    %v181 = vld [vmem:[#allocation2 + $0x380] sm:$0xff]
    %v182 = vld [vmem:[#allocation2 + $0x388] sm:$0xff]
    %v183 = vld [vmem:[#allocation2 + $0x390] sm:$0xff]
    %v184 = vld [vmem:[#allocation2 + $0x398] sm:$0xff]
    %v185 = vld [vmem:[#allocation2 + $0x3a0] sm:$0xff]
    %v186 = vld [vmem:[#allocation2 + $0x3a8] sm:$0xff]
    %v187 = vld [vmem:[#allocation2 + $0x3b0] sm:$0xff]
    %v188 = vld [vmem:[#allocation2 + $0x3b8] sm:$0xff]
    %v189 = vld [vmem:[#allocation2 + $0x3c0] sm:$0xff]
    %v190 = vld [vmem:[#allocation2 + $0x3c8] sm:$0xff]
    %v191 = vld [vmem:[#allocation2 + $0x3d0] sm:$0xff]
    %v192 = vld [vmem:[#allocation2 + $0x3d8] sm:$0xff]
    %v193 = vld [vmem:[#allocation2 + $0x3e0] sm:$0xff]
    %v194 = vld [vmem:[#allocation2 + $0x3e8] sm:$0xff]
    %v195 = vld [vmem:[#allocation2 + $0x3f0] sm:$0xff]
    %v196 = vld [vmem:[#allocation2 + $0x3f8] sm:$0xff]
    %v197 = vld [vmem:[#allocation2 + $0x400] sm:$0xff]
    %v198 = vld [vmem:[#allocation2 + $0x408] sm:$0xff]
    %v199 = vld [vmem:[#allocation2 + $0x410] sm:$0xff]
    %v200 = vld [vmem:[#allocation2 + $0x418] sm:$0xff]
    %v201 = vld [vmem:[#allocation2 + $0x420] sm:$0xff]
    %v202 = vld [vmem:[#allocation2 + $0x428] sm:$0xff]
    %v203 = vld [vmem:[#allocation2 + $0x430] sm:$0xff]
    %v204 = vld [vmem:[#allocation2 + $0x438] sm:$0xff]
    %v205 = vld [vmem:[#allocation2 + $0x440] sm:$0xff]
    %v206 = vld [vmem:[#allocation2 + $0x448] sm:$0xff]
    %v207 = vld [vmem:[#allocation2 + $0x450] sm:$0xff]
    %v208 = vld [vmem:[#allocation2 + $0x458] sm:$0xff]
    %v209 = vld [vmem:[#allocation2 + $0x460] sm:$0xff]
    %v210 = vld [vmem:[#allocation2 + $0x468] sm:$0xff]
    %v211 = vld [vmem:[#allocation2 + $0x470] sm:$0xff]
    %v212 = vld [vmem:[#allocation2 + $0x478] sm:$0xff]
    %v213 = vld [vmem:[#allocation2 + $0x480] sm:$0xff]
    %v214 = vld [vmem:[#allocation2 + $0x488] sm:$0xff]
    %v215 = vld [vmem:[#allocation2 + $0x490] sm:$0xff]
    %v216 = vld [vmem:[#allocation2 + $0x498] sm:$0xff]
    %v217 = vld [vmem:[#allocation2 + $0x4a0] sm:$0xff]
    %v218 = vld [vmem:[#allocation2 + $0x4a8] sm:$0xff]
    %v219 = vld [vmem:[#allocation2 + $0x4b0] sm:$0xff]
    %v220 = vld [vmem:[#allocation2 + $0x4b8] sm:$0xff]
    %v221 = vld [vmem:[#allocation2 + $0x4c0] sm:$0xff]
    %v222 = vld [vmem:[#allocation2 + $0x4c8] sm:$0xff]
    %v223 = vld [vmem:[#allocation2 + $0x4d0] sm:$0xff]
    %v224 = vld [vmem:[#allocation2 + $0x4d8] sm:$0xff]
    %v225 = vld [vmem:[#allocation2 + $0x4e0] sm:$0xff]
    %v226 = vld [vmem:[#allocation2 + $0x4e8] sm:$0xff]
    %v227 = vld [vmem:[#allocation2 + $0x4f0] sm:$0xff]
    %v228 = vld [vmem:[#allocation2 + $0x4f8] sm:$0xff]
    %v229 = vld [vmem:[#allocation2 + $0x500] sm:$0xff]
    %v230 = vld [vmem:[#allocation2 + $0x508] sm:$0xff]
    %v231 = vld [vmem:[#allocation2 + $0x510] sm:$0xff]
    %v232 = vld [vmem:[#allocation2 + $0x518] sm:$0xff]
    %v233 = vld [vmem:[#allocation2 + $0x520] sm:$0xff]
    %v234 = vld [vmem:[#allocation2 + $0x528] sm:$0xff]
    %v235 = vld [vmem:[#allocation2 + $0x530] sm:$0xff]
    %v236 = vld [vmem:[#allocation2 + $0x538] sm:$0xff]
    %v237 = vld [vmem:[#allocation2 + $0x540] sm:$0xff]
    %v238 = vld [vmem:[#allocation2 + $0x548] sm:$0xff]
    %v239 = vld [vmem:[#allocation2 + $0x550] sm:$0xff]
    %v240 = vld [vmem:[#allocation2 + $0x558] sm:$0xff]
    %v241 = vld [vmem:[#allocation2 + $0x560] sm:$0xff]
    %v242 = vld [vmem:[#allocation2 + $0x568] sm:$0xff]
    %v243 = vld [vmem:[#allocation2 + $0x570] sm:$0xff]
    %v244 = vld [vmem:[#allocation2 + $0x578] sm:$0xff]
    %v245 = vld [vmem:[#allocation2 + $0x580] sm:$0xff]
    %v246 = vld [vmem:[#allocation2 + $0x588] sm:$0xff]
    %v247 = vld [vmem:[#allocation2 + $0x590] sm:$0xff]
    %v248 = vld [vmem:[#allocation2 + $0x598] sm:$0xff]
    %v249 = vld [vmem:[#allocation2 + $0x5a0] sm:$0xff]
    %v250 = vld [vmem:[#allocation2 + $0x5a8] sm:$0xff]
    %v251 = vld [vmem:[#allocation2 + $0x5b0] sm:$0xff]
    %v252 = vld [vmem:[#allocation2 + $0x5b8] sm:$0xff]
    %v253 = vld [vmem:[#allocation2 + $0x5c0] sm:$0xff]
    %v254 = vld [vmem:[#allocation2 + $0x5c8] sm:$0xff]
    %v255 = vld [vmem:[#allocation2 + $0x5d0] sm:$0xff]
    %v256 = vld [vmem:[#allocation2 + $0x5d8] sm:$0xff]
    %v257 = vld [vmem:[#allocation2 + $0x5e0] sm:$0xff]
    %v258 = vld [vmem:[#allocation2 + $0x5e8] sm:$0xff]
    %v259 = vld [vmem:[#allocation2 + $0x5f0] sm:$0xff]
    %v260 = vld [vmem:[#allocation2 + $0x5f8] sm:$0xff]
    %v261 = vld [vmem:[#allocation2 + $0x600] sm:$0xff]
    %v262 = vld [vmem:[#allocation2 + $0x608] sm:$0xff]
    %v263 = vld [vmem:[#allocation2 + $0x610] sm:$0xff]
    %v264 = vld [vmem:[#allocation2 + $0x618] sm:$0xff]
    %v265 = vld [vmem:[%s2] sm:$0xf]
    %v267 = vlaneseq
    %v268 = vshrl.u32 %v267, 7
    %v269 = vsub.s32 0, %v268
    %v270 = vrot.slane %v265, %v269
    %v271 = vlaneseq
    %v272 = vshrl.u32 %v271, 7
    %v273 = vsub.s32 1, %v272
    %v274 = vrot.slane %v265, %v273
    %v275 = vlaneseq
    %v276 = vshrl.u32 %v275, 7
    %v277 = vsub.s32 2, %v276
    %v278 = vrot.slane %v265, %v277
    %v279 = vlaneseq
    %v280 = vshrl.u32 %v279, 7
    %v281 = vsub.s32 3, %v280
    %v282 = vrot.slane %v265, %v281
    %v483 = vunpack.c.l.b16 %v69
    %v484 = vunpack.c.h.b16 %v69
    %v485 = vunpack.c.l.b16 %v70
    %v486 = vunpack.c.h.b16 %v70
    %v487 = vunpack.c.l.b16 %v71
    %v488 = vunpack.c.h.b16 %v71
    %v489 = vunpack.c.l.b16 %v72
    %v490 = vunpack.c.h.b16 %v72
    %v491 = vunpack.c.l.b16 %v73
    %v492 = vunpack.c.h.b16 %v73
    %v493 = vunpack.c.l.b16 %v74
    %v494 = vunpack.c.h.b16 %v74
    %v495 = vunpack.c.l.b16 %v75
    %v496 = vunpack.c.h.b16 %v75
    %v497 = vunpack.c.l.b16 %v76
    %v498 = vunpack.c.h.b16 %v76
    %v499 = vunpack.c.l.b16 %v77
    %v500 = vunpack.c.h.b16 %v77
    %v501 = vunpack.c.l.b16 %v78
    %v502 = vunpack.c.h.b16 %v78
    %v503 = vunpack.c.l.b16 %v79
    %v504 = vunpack.c.h.b16 %v79
    %v505 = vunpack.c.l.b16 %v80
    %v506 = vunpack.c.h.b16 %v80
    %v507 = vunpack.c.l.b16 %v81
    %v508 = vunpack.c.h.b16 %v81
    %v509 = vunpack.c.l.b16 %v82
    %v510 = vunpack.c.h.b16 %v82
    %v511 = vunpack.c.l.b16 %v83
    %v512 = vunpack.c.h.b16 %v83
    %v513 = vunpack.c.l.b16 %v84
    %v514 = vunpack.c.h.b16 %v84
    %v515 = vunpack.c.l.b16 %v85
    %v516 = vunpack.c.h.b16 %v85
    %v517 = vunpack.c.l.b16 %v86
    %v518 = vunpack.c.h.b16 %v86
    %v519 = vunpack.c.l.b16 %v87
    %v520 = vunpack.c.h.b16 %v87
    %v521 = vunpack.c.l.b16 %v88
    %v522 = vunpack.c.h.b16 %v88
    %v523 = vunpack.c.l.b16 %v89
    %v524 = vunpack.c.h.b16 %v89
    %v525 = vunpack.c.l.b16 %v90
    %v526 = vunpack.c.h.b16 %v90
    %v527 = vunpack.c.l.b16 %v91
    %v528 = vunpack.c.h.b16 %v91
    %v529 = vunpack.c.l.b16 %v92
    %v530 = vunpack.c.h.b16 %v92
    %v531 = vunpack.c.l.b16 %v93
    %v532 = vunpack.c.h.b16 %v93
    %v533 = vunpack.c.l.b16 %v94
    %v534 = vunpack.c.h.b16 %v94
    %v535 = vunpack.c.l.b16 %v95
    %v536 = vunpack.c.h.b16 %v95
    %v537 = vunpack.c.l.b16 %v96
    %v538 = vunpack.c.h.b16 %v96
    %v539 = vunpack.c.l.b16 %v97
    %v540 = vunpack.c.h.b16 %v97
    %v541 = vunpack.c.l.b16 %v98
    %v542 = vunpack.c.h.b16 %v98
    %v543 = vunpack.c.l.b16 %v99
    %v544 = vunpack.c.h.b16 %v99
    %v545 = vunpack.c.l.b16 %v100
    %v546 = vunpack.c.h.b16 %v100
    %v547 = vunpack.c.l.b16 %v101
    %v548 = vunpack.c.h.b16 %v101
    %v549 = vunpack.c.l.b16 %v102
    %v550 = vunpack.c.h.b16 %v102
    %v551 = vunpack.c.l.b16 %v103
    %v552 = vunpack.c.h.b16 %v103
    %v553 = vunpack.c.l.b16 %v104
    %v554 = vunpack.c.h.b16 %v104
    %v555 = vunpack.c.l.b16 %v105
    %v556 = vunpack.c.h.b16 %v105
    %v557 = vunpack.c.l.b16 %v106
    %v558 = vunpack.c.h.b16 %v106
    %v559 = vunpack.c.l.b16 %v107
    %v560 = vunpack.c.h.b16 %v107
    %v561 = vunpack.c.l.b16 %v108
    %v562 = vunpack.c.h.b16 %v108
    %v563 = vunpack.c.l.b16 %v109
    %v564 = vunpack.c.h.b16 %v109
    %v565 = vunpack.c.l.b16 %v110
    %v566 = vunpack.c.h.b16 %v110
    %v567 = vunpack.c.l.b16 %v111
    %v568 = vunpack.c.h.b16 %v111
    %v569 = vunpack.c.l.b16 %v112
    %v570 = vunpack.c.h.b16 %v112
    %v571 = vunpack.c.l.b16 %v113
    %v572 = vunpack.c.h.b16 %v113
    %v573 = vunpack.c.l.b16 %v114
    %v574 = vunpack.c.h.b16 %v114
    %v575 = vunpack.c.l.b16 %v115
    %v576 = vunpack.c.h.b16 %v115
    %v577 = vunpack.c.l.b16 %v116
    %v578 = vunpack.c.h.b16 %v116
    %v579 = vunpack.c.l.b16 %v117
    %v580 = vunpack.c.h.b16 %v117
    %v581 = vunpack.c.l.b16 %v118
    %v582 = vunpack.c.h.b16 %v118
    %v583 = vunpack.c.l.b16 %v119
    %v584 = vunpack.c.h.b16 %v119
    %v585 = vunpack.c.l.b16 %v120
    %v586 = vunpack.c.h.b16 %v120
    %v587 = vunpack.c.l.b16 %v121
    %v588 = vunpack.c.h.b16 %v121
    %v589 = vunpack.c.l.b16 %v122
    %v590 = vunpack.c.h.b16 %v122
    %v591 = vunpack.c.l.b16 %v123
    %v592 = vunpack.c.h.b16 %v123
    %v593 = vunpack.c.l.b16 %v124
    %v594 = vunpack.c.h.b16 %v124
    %v595 = vunpack.c.l.b16 %v125
    %v596 = vunpack.c.h.b16 %v125
    %v597 = vunpack.c.l.b16 %v126
    %v598 = vunpack.c.h.b16 %v126
    %v599 = vunpack.c.l.b16 %v127
    %v600 = vunpack.c.h.b16 %v127
    %v601 = vunpack.c.l.b16 %v128
    %v602 = vunpack.c.h.b16 %v128
    %v603 = vunpack.c.l.b16 %v129
    %v604 = vunpack.c.h.b16 %v129
    %v605 = vunpack.c.l.b16 %v130
    %v606 = vunpack.c.h.b16 %v130
    %v607 = vunpack.c.l.b16 %v131
    %v608 = vunpack.c.h.b16 %v131
    %v609 = vunpack.c.l.b16 %v132
    %v610 = vunpack.c.h.b16 %v132
    %v611 = vunpack.c.l.b16 %v133
    %v612 = vunpack.c.h.b16 %v133
    %v613 = vunpack.c.l.b16 %v134
    %v614 = vunpack.c.h.b16 %v134
    %v615 = vunpack.c.l.b16 %v135
    %v616 = vunpack.c.h.b16 %v135
    %v617 = vunpack.c.l.b16 %v136
    %v618 = vunpack.c.h.b16 %v136
    %v619 = vunpack.c.l.b16 %v137
    %v620 = vunpack.c.h.b16 %v137
    %v621 = vunpack.c.l.b16 %v138
    %v622 = vunpack.c.h.b16 %v138
    %v623 = vunpack.c.l.b16 %v139
    %v624 = vunpack.c.h.b16 %v139
    %v625 = vunpack.c.l.b16 %v140
    %v626 = vunpack.c.h.b16 %v140
    %v627 = vunpack.c.l.b16 %v141
    %v628 = vunpack.c.h.b16 %v141
    %v629 = vunpack.c.l.b16 %v142
    %v630 = vunpack.c.h.b16 %v142
    %v631 = vunpack.c.l.b16 %v143
    %v632 = vunpack.c.h.b16 %v143
    %v633 = vunpack.c.l.b16 %v144
    %v634 = vunpack.c.h.b16 %v144
    %v635 = vunpack.c.l.b16 %v145
    %v636 = vunpack.c.h.b16 %v145
    %v637 = vunpack.c.l.b16 %v146
    %v638 = vunpack.c.h.b16 %v146
    %v639 = vunpack.c.l.b16 %v147
    %v640 = vunpack.c.h.b16 %v147
    %v641 = vunpack.c.l.b16 %v148
    %v642 = vunpack.c.h.b16 %v148
    %v643 = vunpack.c.l.b16 %v149
    %v644 = vunpack.c.h.b16 %v149
    %v645 = vunpack.c.l.b16 %v150
    %v646 = vunpack.c.h.b16 %v150
    %v647 = vunpack.c.l.b16 %v151
    %v648 = vunpack.c.h.b16 %v151
    %v649 = vunpack.c.l.b16 %v152
    %v650 = vunpack.c.h.b16 %v152
    %v651 = vunpack.c.l.b16 %v153
    %v652 = vunpack.c.h.b16 %v153
    %v653 = vunpack.c.l.b16 %v154
    %v654 = vunpack.c.h.b16 %v154
    %v655 = vunpack.c.l.b16 %v155
    %v656 = vunpack.c.h.b16 %v155
    %v657 = vunpack.c.l.b16 %v156
    %v658 = vunpack.c.h.b16 %v156
    %v659 = vunpack.c.l.b16 %v157
    %v660 = vunpack.c.h.b16 %v157
    %v661 = vunpack.c.l.b16 %v158
    %v662 = vunpack.c.h.b16 %v158
    %v663 = vunpack.c.l.b16 %v159
    %v664 = vunpack.c.h.b16 %v159
    %v665 = vunpack.c.l.b16 %v160
    %v666 = vunpack.c.h.b16 %v160
    %v667 = vunpack.c.l.b16 %v161
    %v668 = vunpack.c.h.b16 %v161
    %v669 = vunpack.c.l.b16 %v162
    %v670 = vunpack.c.h.b16 %v162
    %v671 = vunpack.c.l.b16 %v163
    %v672 = vunpack.c.h.b16 %v163
    %v673 = vunpack.c.l.b16 %v164
    %v674 = vunpack.c.h.b16 %v164
    %v675 = vunpack.c.l.b16 %v165
    %v676 = vunpack.c.h.b16 %v165
    %v677 = vunpack.c.l.b16 %v166
    %v678 = vunpack.c.h.b16 %v166
    %v679 = vunpack.c.l.b16 %v167
    %v680 = vunpack.c.h.b16 %v167
    %v681 = vunpack.c.l.b16 %v168
    %v682 = vunpack.c.h.b16 %v168
    %v683 = vunpack.c.l.b16 %v169
    %v684 = vunpack.c.h.b16 %v169
    %v685 = vunpack.c.l.b16 %v170
    %v686 = vunpack.c.h.b16 %v170
    %v687 = vunpack.c.l.b16 %v171
    %v688 = vunpack.c.h.b16 %v171
    %v689 = vunpack.c.l.b16 %v172
    %v690 = vunpack.c.h.b16 %v172
    %v691 = vunpack.c.l.b16 %v173
    %v692 = vunpack.c.h.b16 %v173
    %v693 = vunpack.c.l.b16 %v174
    %v694 = vunpack.c.h.b16 %v174
    %v695 = vunpack.c.l.b16 %v175
    %v696 = vunpack.c.h.b16 %v175
    %v697 = vunpack.c.l.b16 %v176
    %v698 = vunpack.c.h.b16 %v176
    %v699 = vunpack.c.l.b16 %v177
    %v700 = vunpack.c.h.b16 %v177
    %v701 = vunpack.c.l.b16 %v178
    %v702 = vunpack.c.h.b16 %v178
    %v703 = vunpack.c.l.b16 %v179
    %v704 = vunpack.c.h.b16 %v179
    %v705 = vunpack.c.l.b16 %v180
    %v706 = vunpack.c.h.b16 %v180
    %v707 = vunpack.c.l.b16 %v181
    %v708 = vunpack.c.h.b16 %v181
    %v709 = vunpack.c.l.b16 %v182
    %v710 = vunpack.c.h.b16 %v182
    %v711 = vunpack.c.l.b16 %v183
    %v712 = vunpack.c.h.b16 %v183
    %v713 = vunpack.c.l.b16 %v184
    %v714 = vunpack.c.h.b16 %v184
    %v715 = vunpack.c.l.b16 %v185
    %v716 = vunpack.c.h.b16 %v185
    %v717 = vunpack.c.l.b16 %v186
    %v718 = vunpack.c.h.b16 %v186
    %v719 = vunpack.c.l.b16 %v187
    %v720 = vunpack.c.h.b16 %v187
    %v721 = vunpack.c.l.b16 %v188
    %v722 = vunpack.c.h.b16 %v188
    %v723 = vunpack.c.l.b16 %v189
    %v724 = vunpack.c.h.b16 %v189
    %v725 = vunpack.c.l.b16 %v190
    %v726 = vunpack.c.h.b16 %v190
    %v727 = vunpack.c.l.b16 %v191
    %v728 = vunpack.c.h.b16 %v191
    %v729 = vunpack.c.l.b16 %v192
    %v730 = vunpack.c.h.b16 %v192
    %v731 = vunpack.c.l.b16 %v193
    %v732 = vunpack.c.h.b16 %v193
    %v733 = vunpack.c.l.b16 %v194
    %v734 = vunpack.c.h.b16 %v194
    %v735 = vunpack.c.l.b16 %v195
    %v736 = vunpack.c.h.b16 %v195
    %v737 = vunpack.c.l.b16 %v196
    %v738 = vunpack.c.h.b16 %v196
    %v739 = vunpack.c.l.b16 %v197
    %v740 = vunpack.c.h.b16 %v197
    %v741 = vunpack.c.l.b16 %v198
    %v742 = vunpack.c.h.b16 %v198
    %v743 = vunpack.c.l.b16 %v199
    %v744 = vunpack.c.h.b16 %v199
    %v745 = vunpack.c.l.b16 %v200
    %v746 = vunpack.c.h.b16 %v200
    %v747 = vunpack.c.l.b16 %v201
    %v748 = vunpack.c.h.b16 %v201
    %v749 = vunpack.c.l.b16 %v202
    %v750 = vunpack.c.h.b16 %v202
    %v751 = vunpack.c.l.b16 %v203
    %v752 = vunpack.c.h.b16 %v203
    %v753 = vunpack.c.l.b16 %v204
    %v754 = vunpack.c.h.b16 %v204
    %v755 = vunpack.c.l.b16 %v205
    %v756 = vunpack.c.h.b16 %v205
    %v757 = vunpack.c.l.b16 %v206
    %v758 = vunpack.c.h.b16 %v206
    %v759 = vunpack.c.l.b16 %v207
    %v760 = vunpack.c.h.b16 %v207
    %v761 = vunpack.c.l.b16 %v208
    %v762 = vunpack.c.h.b16 %v208
    %v763 = vunpack.c.l.b16 %v209
    %v764 = vunpack.c.h.b16 %v209
    %v765 = vunpack.c.l.b16 %v210
    %v766 = vunpack.c.h.b16 %v210
    %v767 = vunpack.c.l.b16 %v211
    %v768 = vunpack.c.h.b16 %v211
    %v769 = vunpack.c.l.b16 %v212
    %v770 = vunpack.c.h.b16 %v212
    %v771 = vunpack.c.l.b16 %v213
    %v772 = vunpack.c.h.b16 %v213
    %v773 = vunpack.c.l.b16 %v214
    %v774 = vunpack.c.h.b16 %v214
    %v775 = vunpack.c.l.b16 %v215
    %v776 = vunpack.c.h.b16 %v215
    %v777 = vunpack.c.l.b16 %v216
    %v778 = vunpack.c.h.b16 %v216
    %v779 = vunpack.c.l.b16 %v217
    %v780 = vunpack.c.h.b16 %v217
    %v781 = vunpack.c.l.b16 %v218
    %v782 = vunpack.c.h.b16 %v218
    %v783 = vunpack.c.l.b16 %v219
    %v784 = vunpack.c.h.b16 %v219
    %v785 = vunpack.c.l.b16 %v220
    %v786 = vunpack.c.h.b16 %v220
    %v787 = vunpack.c.l.b16 %v221
    %v788 = vunpack.c.h.b16 %v221
    %v789 = vunpack.c.l.b16 %v222
    %v790 = vunpack.c.h.b16 %v222
    %v791 = vunpack.c.l.b16 %v223
    %v792 = vunpack.c.h.b16 %v223
    %v793 = vunpack.c.l.b16 %v224
    %v794 = vunpack.c.h.b16 %v224
    %v795 = vunpack.c.l.b16 %v225
    %v796 = vunpack.c.h.b16 %v225
    %v797 = vunpack.c.l.b16 %v226
    %v798 = vunpack.c.h.b16 %v226
    %v799 = vunpack.c.l.b16 %v227
    %v800 = vunpack.c.h.b16 %v227
    %v801 = vunpack.c.l.b16 %v228
    %v802 = vunpack.c.h.b16 %v228
    %v803 = vunpack.c.l.b16 %v229
    %v804 = vunpack.c.h.b16 %v229
    %v805 = vunpack.c.l.b16 %v230
    %v806 = vunpack.c.h.b16 %v230
    %v807 = vunpack.c.l.b16 %v231
    %v808 = vunpack.c.h.b16 %v231
    %v809 = vunpack.c.l.b16 %v232
    %v810 = vunpack.c.h.b16 %v232
    %v811 = vunpack.c.l.b16 %v233
    %v812 = vunpack.c.h.b16 %v233
    %v813 = vunpack.c.l.b16 %v234
    %v814 = vunpack.c.h.b16 %v234
    %v815 = vunpack.c.l.b16 %v235
    %v816 = vunpack.c.h.b16 %v235
    %v817 = vunpack.c.l.b16 %v236
    %v818 = vunpack.c.h.b16 %v236
    %v819 = vunpack.c.l.b16 %v237
    %v820 = vunpack.c.h.b16 %v237
    %v821 = vunpack.c.l.b16 %v238
    %v822 = vunpack.c.h.b16 %v238
    %v823 = vunpack.c.l.b16 %v239
    %v824 = vunpack.c.h.b16 %v239
    %v825 = vunpack.c.l.b16 %v240
    %v826 = vunpack.c.h.b16 %v240
    %v827 = vunpack.c.l.b16 %v241
    %v828 = vunpack.c.h.b16 %v241
    %v829 = vunpack.c.l.b16 %v242
    %v830 = vunpack.c.h.b16 %v242
    %v831 = vunpack.c.l.b16 %v243
    %v832 = vunpack.c.h.b16 %v243
    %v833 = vunpack.c.l.b16 %v244
    %v834 = vunpack.c.h.b16 %v244
    %v835 = vunpack.c.l.b16 %v245
    %v836 = vunpack.c.h.b16 %v245
    %v837 = vunpack.c.l.b16 %v246
    %v838 = vunpack.c.h.b16 %v246
    %v839 = vunpack.c.l.b16 %v247
    %v840 = vunpack.c.h.b16 %v247
    %v841 = vunpack.c.l.b16 %v248
    %v842 = vunpack.c.h.b16 %v248
    %v843 = vunpack.c.l.b16 %v249
    %v844 = vunpack.c.h.b16 %v249
    %v845 = vunpack.c.l.b16 %v250
    %v846 = vunpack.c.h.b16 %v250
    %v847 = vunpack.c.l.b16 %v251
    %v848 = vunpack.c.h.b16 %v251
    %v849 = vunpack.c.l.b16 %v252
    %v850 = vunpack.c.h.b16 %v252
    %v851 = vunpack.c.l.b16 %v253
    %v852 = vunpack.c.h.b16 %v253
    %v853 = vunpack.c.l.b16 %v254
    %v854 = vunpack.c.h.b16 %v254
    %v855 = vunpack.c.l.b16 %v255
    %v856 = vunpack.c.h.b16 %v255
    %v857 = vunpack.c.l.b16 %v256
    %v858 = vunpack.c.h.b16 %v256
    %v859 = vunpack.c.l.b16 %v257
    %v860 = vunpack.c.h.b16 %v257
    %v861 = vunpack.c.l.b16 %v258
    %v862 = vunpack.c.h.b16 %v258
    %v863 = vunpack.c.l.b16 %v259
    %v864 = vunpack.c.h.b16 %v259
    %v865 = vunpack.c.l.b16 %v260
    %v866 = vunpack.c.h.b16 %v260
    %v867 = vunpack.c.l.b16 %v261
    %v868 = vunpack.c.h.b16 %v261
    %v869 = vunpack.c.l.b16 %v262
    %v870 = vunpack.c.h.b16 %v262
    %v871 = vunpack.c.l.b16 %v263
    %v872 = vunpack.c.h.b16 %v263
    %v873 = vunpack.c.l.b16 %v264
    %v874 = vunpack.c.h.b16 %v264
    %v875 = vpack.c.b16 %v487, %v483
    %v876 = vpack.c.b16 %v488, %v484
    %v877 = vpack.c.b16 %v489, %v485
    %v878 = vpack.c.b16 %v490, %v486
    %v879 = vpack.c.b16 %v495, %v491
    %v880 = vpack.c.b16 %v496, %v492
    %v881 = vpack.c.b16 %v497, %v493
    %v882 = vpack.c.b16 %v498, %v494
    %v883 = vpack.c.b16 %v503, %v499
    %v884 = vpack.c.b16 %v504, %v500
    %v885 = vpack.c.b16 %v505, %v501
    %v886 = vpack.c.b16 %v506, %v502
    %v887 = vpack.c.b16 %v511, %v507
    %v888 = vpack.c.b16 %v512, %v508
    %v889 = vpack.c.b16 %v513, %v509
    %v890 = vpack.c.b16 %v514, %v510
    %v891 = vpack.c.b16 %v519, %v515
    %v892 = vpack.c.b16 %v520, %v516
    %v893 = vpack.c.b16 %v521, %v517
    %v894 = vpack.c.b16 %v522, %v518
    %v895 = vpack.c.b16 %v527, %v523
    %v896 = vpack.c.b16 %v528, %v524
    %v897 = vpack.c.b16 %v529, %v525
    %v898 = vpack.c.b16 %v530, %v526
    %v899 = vpack.c.b16 %v535, %v531
    %v900 = vpack.c.b16 %v536, %v532
    %v901 = vpack.c.b16 %v537, %v533
    %v902 = vpack.c.b16 %v538, %v534
    %v903 = vpack.c.b16 %v543, %v539
    %v904 = vpack.c.b16 %v544, %v540
    %v905 = vpack.c.b16 %v545, %v541
    %v906 = vpack.c.b16 %v546, %v542
    %v907 = vpack.c.b16 %v551, %v547
    %v908 = vpack.c.b16 %v552, %v548
    %v909 = vpack.c.b16 %v553, %v549
    %v910 = vpack.c.b16 %v554, %v550
    %v911 = vpack.c.b16 %v559, %v555
    %v912 = vpack.c.b16 %v560, %v556
    %v913 = vpack.c.b16 %v561, %v557
    %v914 = vpack.c.b16 %v562, %v558
    %v915 = vpack.c.b16 %v567, %v563
    %v916 = vpack.c.b16 %v568, %v564
    %v917 = vpack.c.b16 %v569, %v565
    %v918 = vpack.c.b16 %v570, %v566
    %v919 = vpack.c.b16 %v575, %v571
    %v920 = vpack.c.b16 %v576, %v572
    %v921 = vpack.c.b16 %v577, %v573
    %v922 = vpack.c.b16 %v578, %v574
    %v923 = vpack.c.b16 %v583, %v579
    %v924 = vpack.c.b16 %v584, %v580
    %v925 = vpack.c.b16 %v585, %v581
    %v926 = vpack.c.b16 %v586, %v582
    %v927 = vpack.c.b16 %v591, %v587
    %v928 = vpack.c.b16 %v592, %v588
    %v929 = vpack.c.b16 %v593, %v589
    %v930 = vpack.c.b16 %v594, %v590
    %v931 = vpack.c.b16 %v599, %v595
    %v932 = vpack.c.b16 %v600, %v596
    %v933 = vpack.c.b16 %v601, %v597
    %v934 = vpack.c.b16 %v602, %v598
    %v935 = vpack.c.b16 %v607, %v603
    %v936 = vpack.c.b16 %v608, %v604
    %v937 = vpack.c.b16 %v609, %v605
    %v938 = vpack.c.b16 %v610, %v606
    %v939 = vpack.c.b16 %v615, %v611
    %v940 = vpack.c.b16 %v616, %v612
    %v941 = vpack.c.b16 %v617, %v613
    %v942 = vpack.c.b16 %v618, %v614
    %v943 = vpack.c.b16 %v623, %v619
    %v944 = vpack.c.b16 %v624, %v620
    %v945 = vpack.c.b16 %v625, %v621
    %v946 = vpack.c.b16 %v626, %v622
    %v947 = vpack.c.b16 %v631, %v627
    %v948 = vpack.c.b16 %v632, %v628
    %v949 = vpack.c.b16 %v633, %v629
    %v950 = vpack.c.b16 %v634, %v630
    %v951 = vpack.c.b16 %v639, %v635
    %v952 = vpack.c.b16 %v640, %v636
    %v953 = vpack.c.b16 %v641, %v637
    %v954 = vpack.c.b16 %v642, %v638
    %v955 = vpack.c.b16 %v647, %v643
    %v956 = vpack.c.b16 %v648, %v644
    %v957 = vpack.c.b16 %v649, %v645
    %v958 = vpack.c.b16 %v650, %v646
    %v959 = vpack.c.b16 %v655, %v651
    %v960 = vpack.c.b16 %v656, %v652
    %v961 = vpack.c.b16 %v657, %v653
    %v962 = vpack.c.b16 %v658, %v654
    %v963 = vpack.c.b16 %v663, %v659
    %v964 = vpack.c.b16 %v664, %v660
    %v965 = vpack.c.b16 %v665, %v661
    %v966 = vpack.c.b16 %v666, %v662
    %v967 = vpack.c.b16 %v671, %v667
    %v968 = vpack.c.b16 %v672, %v668
    %v969 = vpack.c.b16 %v673, %v669
    %v970 = vpack.c.b16 %v674, %v670
    %v971 = vpack.c.b16 %v679, %v675
    %v972 = vpack.c.b16 %v680, %v676
    %v973 = vpack.c.b16 %v681, %v677
    %v974 = vpack.c.b16 %v682, %v678
    %v975 = vpack.c.b16 %v687, %v683
    %v976 = vpack.c.b16 %v688, %v684
    %v977 = vpack.c.b16 %v689, %v685
    %v978 = vpack.c.b16 %v690, %v686
    %v979 = vpack.c.b16 %v695, %v691
    %v980 = vpack.c.b16 %v696, %v692
    %v981 = vpack.c.b16 %v697, %v693
    %v982 = vpack.c.b16 %v698, %v694
    %v983 = vpack.c.b16 %v703, %v699
    %v984 = vpack.c.b16 %v704, %v700
    %v985 = vpack.c.b16 %v705, %v701
    %v986 = vpack.c.b16 %v706, %v702
    %v987 = vpack.c.b16 %v711, %v707
    %v988 = vpack.c.b16 %v712, %v708
    %v989 = vpack.c.b16 %v713, %v709
    %v990 = vpack.c.b16 %v714, %v710
    %v991 = vpack.c.b16 %v719, %v715
    %v992 = vpack.c.b16 %v720, %v716
    %v993 = vpack.c.b16 %v721, %v717
    %v994 = vpack.c.b16 %v722, %v718
    %v995 = vpack.c.b16 %v727, %v723
    %v996 = vpack.c.b16 %v728, %v724
    %v997 = vpack.c.b16 %v729, %v725
    %v998 = vpack.c.b16 %v730, %v726
    %v999 = vpack.c.b16 %v735, %v731
    %v1000 = vpack.c.b16 %v736, %v732
    %v1001 = vpack.c.b16 %v737, %v733
    %v1002 = vpack.c.b16 %v738, %v734
    %v1003 = vpack.c.b16 %v743, %v739
    %v1004 = vpack.c.b16 %v744, %v740
    %v1005 = vpack.c.b16 %v745, %v741
    %v1006 = vpack.c.b16 %v746, %v742
    %v1007 = vpack.c.b16 %v751, %v747
    %v1008 = vpack.c.b16 %v752, %v748
    %v1009 = vpack.c.b16 %v753, %v749
    %v1010 = vpack.c.b16 %v754, %v750
    %v1011 = vpack.c.b16 %v759, %v755
    %v1012 = vpack.c.b16 %v760, %v756
    %v1013 = vpack.c.b16 %v761, %v757
    %v1014 = vpack.c.b16 %v762, %v758
    %v1015 = vpack.c.b16 %v767, %v763
    %v1016 = vpack.c.b16 %v768, %v764
    %v1017 = vpack.c.b16 %v769, %v765
    %v1018 = vpack.c.b16 %v770, %v766
    %v1019 = vpack.c.b16 %v775, %v771
    %v1020 = vpack.c.b16 %v776, %v772
    %v1021 = vpack.c.b16 %v777, %v773
    %v1022 = vpack.c.b16 %v778, %v774
    %v1023 = vpack.c.b16 %v783, %v779
    %v1024 = vpack.c.b16 %v784, %v780
    %v1025 = vpack.c.b16 %v785, %v781
    %v1026 = vpack.c.b16 %v786, %v782
    %v1027 = vpack.c.b16 %v791, %v787
    %v1028 = vpack.c.b16 %v792, %v788
    %v1029 = vpack.c.b16 %v793, %v789
    %v1030 = vpack.c.b16 %v794, %v790
    %v1031 = vpack.c.b16 %v799, %v795
    %v1032 = vpack.c.b16 %v800, %v796
    %v1033 = vpack.c.b16 %v801, %v797
    %v1034 = vpack.c.b16 %v802, %v798
    %v1035 = vpack.c.b16 %v807, %v803
    %v1036 = vpack.c.b16 %v808, %v804
    %v1037 = vpack.c.b16 %v809, %v805
    %v1038 = vpack.c.b16 %v810, %v806
    %v1039 = vpack.c.b16 %v815, %v811
    %v1040 = vpack.c.b16 %v816, %v812
    %v1041 = vpack.c.b16 %v817, %v813
    %v1042 = vpack.c.b16 %v818, %v814
    %v1043 = vpack.c.b16 %v823, %v819
    %v1044 = vpack.c.b16 %v824, %v820
    %v1045 = vpack.c.b16 %v825, %v821
    %v1046 = vpack.c.b16 %v826, %v822
    %v1047 = vpack.c.b16 %v831, %v827
    %v1048 = vpack.c.b16 %v832, %v828
    %v1049 = vpack.c.b16 %v833, %v829
    %v1050 = vpack.c.b16 %v834, %v830
    %v1051 = vpack.c.b16 %v839, %v835
    %v1052 = vpack.c.b16 %v840, %v836
    %v1053 = vpack.c.b16 %v841, %v837
    %v1054 = vpack.c.b16 %v842, %v838
    %v1055 = vpack.c.b16 %v847, %v843
    %v1056 = vpack.c.b16 %v848, %v844
    %v1057 = vpack.c.b16 %v849, %v845
    %v1058 = vpack.c.b16 %v850, %v846
    %v1059 = vpack.c.b16 %v855, %v851
    %v1060 = vpack.c.b16 %v856, %v852
    %v1061 = vpack.c.b16 %v857, %v853
    %v1062 = vpack.c.b16 %v858, %v854
    %v1063 = vpack.c.b16 %v863, %v859
    %v1064 = vpack.c.b16 %v864, %v860
    %v1065 = vpack.c.b16 %v865, %v861
    %v1066 = vpack.c.b16 %v866, %v862
    %v1067 = vpack.c.b16 %v871, %v867
    %v1068 = vpack.c.b16 %v872, %v868
    %v1069 = vpack.c.b16 %v873, %v869
    %v1070 = vpack.c.b16 %v874, %v870
    %vm1267 = vcmask 130048
    %v1269 = vsel %vm1267, %v68, 0
    %1271 = vmatprep.subr.bf16.mxu0 %v876
    %1272 = vmatpush1.bf16.msra.mxu0 %v875
    %1273 = vmatprep.subr.bf16.mxu0 %v880
    %1274 = vmatpush1.bf16.msra.mxu0 %v879
    %1275 = vmatprep.subr.bf16.mxu0 %v884
    %1276 = vmatpush1.bf16.msra.mxu0 %v883
    %1277 = vmatprep.subr.bf16.mxu0 %v888
    %1278 = vmatpush1.bf16.msra.mxu0 %v887
    %1279 = vmatprep.subr.bf16.mxu0 %v892
    %1280 = vmatpush1.bf16.msra.mxu0 %v891
    %1281 = vmatprep.subr.bf16.mxu0 %v896
    %1282 = vmatpush1.bf16.msra.mxu0 %v895
    %1283 = vmatprep.subr.bf16.mxu0 %v900
    %1284 = vmatpush1.bf16.msra.mxu0 %v899
    %1285 = vmatprep.subr.bf16.mxu0 %v904
    %1286 = vmatpush1.bf16.msra.mxu0 %v903
    %1287 = vmatprep.subr.bf16.mxu0 %v908
    %1288 = vmatpush1.bf16.msra.mxu0 %v907
    %1289 = vmatprep.subr.bf16.mxu0 %v912
    %1290 = vmatpush1.bf16.msra.mxu0 %v911
    %1291 = vmatprep.subr.bf16.mxu0 %v916
    %1292 = vmatpush1.bf16.msra.mxu0 %v915
    %1293 = vmatprep.subr.bf16.mxu0 %v920
    %1294 = vmatpush1.bf16.msra.mxu0 %v919
    %1295 = vmatprep.subr.bf16.mxu0 %v924
    %1296 = vmatpush1.bf16.msra.mxu0 %v923
    %1297 = vmatprep.subr.bf16.mxu0 %v928
    %1298 = vmatpush1.bf16.msra.mxu0 %v927
    %1299 = vmatprep.subr.bf16.mxu0 %v932
    %1300 = vmatpush1.bf16.msra.mxu0 %v931
    %1301 = vmatprep.subr.bf16.mxu0 %v936
    %1302 = vmatpush1.bf16.msra.mxu0 %v935
    %1303 = vmatprep.mubr.bf16.mxu0 %v63
    %1304 = vmatmul.mubr.bf16.gmra.mrb[0].mxu0 %v62
    %v1305 = vpop.f32.mrb[0].mxu0
    %v1306 = vadd.f32 %v270, %v1305
    %v1307 = vpop.f32.mrb[0].mxu0
    %v1308 = vadd.f32 %v274, %v1307
    %v1309 = vpop.f32.mrb[0].mxu0
    %v1310 = vpop.f32.mrb[0].mxu0
    %1311 = vdwg.mxu0
    %1312 = vmatprep.subr.bf16.mxu0 %v940
    %1313 = vmatpush1.bf16.msra.mxu0 %v939
    %1314 = vmatprep.subr.bf16.mxu0 %v944
    %1315 = vmatpush1.bf16.msra.mxu0 %v943
    %1316 = vmatprep.subr.bf16.mxu0 %v948
    %1317 = vmatpush1.bf16.msra.mxu0 %v947
    %1318 = vmatprep.subr.bf16.mxu0 %v952
    %1319 = vmatpush1.bf16.msra.mxu0 %v951
    %1320 = vmatprep.subr.bf16.mxu0 %v956
    %1321 = vmatpush1.bf16.msra.mxu0 %v955
    %1322 = vmatprep.subr.bf16.mxu0 %v960
    %1323 = vmatpush1.bf16.msra.mxu0 %v959
    %1324 = vmatprep.subr.bf16.mxu0 %v964
    %1325 = vmatpush1.bf16.msra.mxu0 %v963
    %1326 = vmatprep.subr.bf16.mxu0 %v968
    %1327 = vmatpush1.bf16.msra.mxu0 %v967
    %1328 = vmatprep.subr.bf16.mxu0 %v972
    %1329 = vmatpush1.bf16.msra.mxu0 %v971
    %1330 = vmatprep.subr.bf16.mxu0 %v976
    %1331 = vmatpush1.bf16.msra.mxu0 %v975
    %1332 = vmatprep.subr.bf16.mxu0 %v980
    %1333 = vmatpush1.bf16.msra.mxu0 %v979
    %1334 = vmatprep.subr.bf16.mxu0 %v984
    %1335 = vmatpush1.bf16.msra.mxu0 %v983
    %1336 = vmatprep.subr.bf16.mxu0 %v988
    %1337 = vmatpush1.bf16.msra.mxu0 %v987
    %1338 = vmatprep.subr.bf16.mxu0 %v992
    %1339 = vmatpush1.bf16.msra.mxu0 %v991
    %1340 = vmatprep.subr.bf16.mxu0 %v996
    %1341 = vmatpush1.bf16.msra.mxu0 %v995
    %1342 = vmatprep.subr.bf16.mxu0 %v1000
    %1343 = vmatpush1.bf16.msra.mxu0 %v999
    %1344 = vmatprep.mubr.bf16.mxu0 %v65
    %1345 = vmatmul.mubr.bf16.gmra.mrb[0].mxu0 %v64
    %v1346 = vpop.f32.mrb[0].mxu0
    %v1347 = vadd.f32 %v1306, %v1346
    %v1348 = vpop.f32.mrb[0].mxu0
    %v1349 = vadd.f32 %v1308, %v1348
    %v1350 = vpop.f32.mrb[0].mxu0
    %v1351 = vpop.f32.mrb[0].mxu0
    %1352 = vdwg.mxu0
    %1353 = vmatprep.subr.bf16.mxu0 %v1004
    %1354 = vmatpush1.bf16.msra.mxu0 %v1003
    %1355 = vmatprep.subr.bf16.mxu0 %v1008
    %1356 = vmatpush1.bf16.msra.mxu0 %v1007
    %1357 = vmatprep.subr.bf16.mxu0 %v1012
    %1358 = vmatpush1.bf16.msra.mxu0 %v1011
    %1359 = vmatprep.subr.bf16.mxu0 %v1016
    %1360 = vmatpush1.bf16.msra.mxu0 %v1015
    %1361 = vmatprep.subr.bf16.mxu0 %v1020
    %1362 = vmatpush1.bf16.msra.mxu0 %v1019
    %1363 = vmatprep.subr.bf16.mxu0 %v1024
    %1364 = vmatpush1.bf16.msra.mxu0 %v1023
    %1365 = vmatprep.subr.bf16.mxu0 %v1028
    %1366 = vmatpush1.bf16.msra.mxu0 %v1027
    %1367 = vmatprep.subr.bf16.mxu0 %v1032
    %1368 = vmatpush1.bf16.msra.mxu0 %v1031
    %1369 = vmatprep.subr.bf16.mxu0 %v1036
    %1370 = vmatpush1.bf16.msra.mxu0 %v1035
    %1371 = vmatprep.subr.bf16.mxu0 %v1040
    %1372 = vmatpush1.bf16.msra.mxu0 %v1039
    %1373 = vmatprep.subr.bf16.mxu0 %v1044
    %1374 = vmatpush1.bf16.msra.mxu0 %v1043
    %1375 = vmatprep.subr.bf16.mxu0 %v1048
    %1376 = vmatpush1.bf16.msra.mxu0 %v1047
    %1377 = vmatprep.subr.bf16.mxu0 %v1052
    %1378 = vmatpush1.bf16.msra.mxu0 %v1051
    %1379 = vmatprep.subr.bf16.mxu0 %v1056
    %1380 = vmatpush1.bf16.msra.mxu0 %v1055
    %1381 = vmatprep.subr.bf16.mxu0 %v1060
    %1382 = vmatpush1.bf16.msra.mxu0 %v1059
    %1383 = vmatprep.subr.bf16.mxu0 %v1064
    %1384 = vmatpush1.bf16.msra.mxu0 %v1063
    %1385 = vmatprep.mubr.bf16.mxu0 %v67
    %1386 = vmatmul.mubr.bf16.gmra.mrb[0].mxu0 %v66
    %v1387 = vpop.f32.mrb[0].mxu0
    %v1388 = vadd.f32 %v1347, %v1387
    %v1389 = vpop.f32.mrb[0].mxu0
    %v1390 = vadd.f32 %v1349, %v1389
    %v1391 = vpop.f32.mrb[0].mxu0
    %v1392 = vpop.f32.mrb[0].mxu0
    %1393 = vdwg.mxu0
    %1394 = vmatprep.subr.bf16.mxu0 %v1068
    %1395 = vmatpush1.bf16.msra.mxu0 %v1067
    %1396 = vmatprep.subr.bf16.mxu0 0
    %1397 = vmatpush1.bf16.msra.mxu0 0
    %1398 = vmatprep.subr.bf16.mxu0 0
    %1399 = vmatpush1.bf16.msra.mxu0 0
    %1400 = vmatprep.subr.bf16.mxu0 0
    %1401 = vmatpush1.bf16.msra.mxu0 0
    %1402 = vmatprep.subr.bf16.mxu0 0
    %1403 = vmatpush1.bf16.msra.mxu0 0
    %1404 = vmatprep.subr.bf16.mxu0 0
    %1405 = vmatpush1.bf16.msra.mxu0 0
    %1406 = vmatprep.subr.bf16.mxu0 0
    %1407 = vmatpush1.bf16.msra.mxu0 0
    %1408 = vmatprep.subr.bf16.mxu0 0
    %1409 = vmatpush1.bf16.msra.mxu0 0
    %1410 = vmatprep.subr.bf16.mxu0 0
    %1411 = vmatpush1.bf16.msra.mxu0 0
    %1412 = vmatprep.subr.bf16.mxu0 0
    %1413 = vmatpush1.bf16.msra.mxu0 0
    %1414 = vmatprep.subr.bf16.mxu0 0
    %1415 = vmatpush1.bf16.msra.mxu0 0
    %1416 = vmatprep.subr.bf16.mxu0 0
    %1417 = vmatpush1.bf16.msra.mxu0 0
    %1418 = vmatprep.subr.bf16.mxu0 0
    %1419 = vmatpush1.bf16.msra.mxu0 0
    %1420 = vmatprep.subr.bf16.mxu0 0
    %1421 = vmatpush1.bf16.msra.mxu0 0
    %1422 = vmatprep.subr.bf16.mxu0 0
    %1423 = vmatpush1.bf16.msra.mxu0 0
    %1424 = vmatprep.subr.bf16.mxu0 0
    %1425 = vmatpush1.bf16.msra.mxu0 0
    %1426 = vmatprep.mubr.bf16.mxu0 0
    %1427 = vmatmul.mubr.bf16.gmra.mrb[0].mxu0 %v1269
    %v1428 = vpop.f32.mrb[0].mxu0
    %v1429 = vadd.f32 %v1388, %v1428
    %v1430 = vpop.f32.mrb[0].mxu0
    %v1431 = vadd.f32 %v1390, %v1430
    %v1432 = vpop.f32.mrb[0].mxu0
    %v1433 = vpop.f32.mrb[0].mxu0
    %1434 = vdwg.mxu0
    %1435 = vmatprep.subr.bf16.mxu0 %v878
    %1436 = vmatpush1.bf16.msra.mxu0 %v877
    %1437 = vmatprep.subr.bf16.mxu0 %v882
    %1438 = vmatpush1.bf16.msra.mxu0 %v881
    %1439 = vmatprep.subr.bf16.mxu0 %v886
    %1440 = vmatpush1.bf16.msra.mxu0 %v885
    %1441 = vmatprep.subr.bf16.mxu0 %v890
    %1442 = vmatpush1.bf16.msra.mxu0 %v889
    %1443 = vmatprep.subr.bf16.mxu0 %v894
    %1444 = vmatpush1.bf16.msra.mxu0 %v893
    %1445 = vmatprep.subr.bf16.mxu0 %v898
    %1446 = vmatpush1.bf16.msra.mxu0 %v897
    %1447 = vmatprep.subr.bf16.mxu0 %v902
    %1448 = vmatpush1.bf16.msra.mxu0 %v901
    %1449 = vmatprep.subr.bf16.mxu0 %v906
    %1450 = vmatpush1.bf16.msra.mxu0 %v905
    %1451 = vmatprep.subr.bf16.mxu0 %v910
    %1452 = vmatpush1.bf16.msra.mxu0 %v909
    %1453 = vmatprep.subr.bf16.mxu0 %v914
    %1454 = vmatpush1.bf16.msra.mxu0 %v913
    %1455 = vmatprep.subr.bf16.mxu0 %v918
    %1456 = vmatpush1.bf16.msra.mxu0 %v917
    %1457 = vmatprep.subr.bf16.mxu0 %v922
    %1458 = vmatpush1.bf16.msra.mxu0 %v921
    %1459 = vmatprep.subr.bf16.mxu0 %v926
    %1460 = vmatpush1.bf16.msra.mxu0 %v925
    %1461 = vmatprep.subr.bf16.mxu0 %v930
    %1462 = vmatpush1.bf16.msra.mxu0 %v929
    %1463 = vmatprep.subr.bf16.mxu0 %v934
    %1464 = vmatpush1.bf16.msra.mxu0 %v933
    %1465 = vmatprep.subr.bf16.mxu0 %v938
    %1466 = vmatpush1.bf16.msra.mxu0 %v937
    %1467 = vmatprep.mubr.bf16.mxu0 %v63
    %1468 = vmatmul.mubr.bf16.gmra.mrb[0].mxu0 %v62
    %v1469 = vpop.f32.mrb[0].mxu0
    %v1470 = vadd.f32 %v278, %v1469
    %v1471 = vpop.f32.mrb[0].mxu0
    %v1472 = vadd.f32 %v282, %v1471
    %v1473 = vpop.f32.mrb[0].mxu0
    %v1474 = vpop.f32.mrb[0].mxu0
    %1475 = vdwg.mxu0
    %1476 = vmatprep.subr.bf16.mxu0 %v942
    %1477 = vmatpush1.bf16.msra.mxu0 %v941
    %1478 = vmatprep.subr.bf16.mxu0 %v946
    %1479 = vmatpush1.bf16.msra.mxu0 %v945
    %1480 = vmatprep.subr.bf16.mxu0 %v950
    %1481 = vmatpush1.bf16.msra.mxu0 %v949
    %1482 = vmatprep.subr.bf16.mxu0 %v954
    %1483 = vmatpush1.bf16.msra.mxu0 %v953
    %1484 = vmatprep.subr.bf16.mxu0 %v958
    %1485 = vmatpush1.bf16.msra.mxu0 %v957
    %1486 = vmatprep.subr.bf16.mxu0 %v962
    %1487 = vmatpush1.bf16.msra.mxu0 %v961
    %1488 = vmatprep.subr.bf16.mxu0 %v966
    %1489 = vmatpush1.bf16.msra.mxu0 %v965
    %1490 = vmatprep.subr.bf16.mxu0 %v970
    %1491 = vmatpush1.bf16.msra.mxu0 %v969
    %1492 = vmatprep.subr.bf16.mxu0 %v974
    %1493 = vmatpush1.bf16.msra.mxu0 %v973
    %1494 = vmatprep.subr.bf16.mxu0 %v978
    %1495 = vmatpush1.bf16.msra.mxu0 %v977
    %1496 = vmatprep.subr.bf16.mxu0 %v982
    %1497 = vmatpush1.bf16.msra.mxu0 %v981
    %1498 = vmatprep.subr.bf16.mxu0 %v986
    %1499 = vmatpush1.bf16.msra.mxu0 %v985
    %1500 = vmatprep.subr.bf16.mxu0 %v990
    %1501 = vmatpush1.bf16.msra.mxu0 %v989
    %1502 = vmatprep.subr.bf16.mxu0 %v994
    %1503 = vmatpush1.bf16.msra.mxu0 %v993
    %1504 = vmatprep.subr.bf16.mxu0 %v998
    %1505 = vmatpush1.bf16.msra.mxu0 %v997
    %1506 = vmatprep.subr.bf16.mxu0 %v1002
    %1507 = vmatpush1.bf16.msra.mxu0 %v1001
    %1508 = vmatprep.mubr.bf16.mxu0 %v65
    %1509 = vmatmul.mubr.bf16.gmra.mrb[0].mxu0 %v64
    %v1510 = vpop.f32.mrb[0].mxu0
    %v1511 = vadd.f32 %v1470, %v1510
    %v1512 = vpop.f32.mrb[0].mxu0
    %v1513 = vadd.f32 %v1472, %v1512
    %v1514 = vpop.f32.mrb[0].mxu0
    %v1515 = vpop.f32.mrb[0].mxu0
    %1516 = vdwg.mxu0
    %1517 = vmatprep.subr.bf16.mxu0 %v1006
    %1518 = vmatpush1.bf16.msra.mxu0 %v1005
    %1519 = vmatprep.subr.bf16.mxu0 %v1010
    %1520 = vmatpush1.bf16.msra.mxu0 %v1009
    %1521 = vmatprep.subr.bf16.mxu0 %v1014
    %1522 = vmatpush1.bf16.msra.mxu0 %v1013
    %1523 = vmatprep.subr.bf16.mxu0 %v1018
    %1524 = vmatpush1.bf16.msra.mxu0 %v1017
    %1525 = vmatprep.subr.bf16.mxu0 %v1022
    %1526 = vmatpush1.bf16.msra.mxu0 %v1021
    %1527 = vmatprep.subr.bf16.mxu0 %v1026
    %1528 = vmatpush1.bf16.msra.mxu0 %v1025
    %1529 = vmatprep.subr.bf16.mxu0 %v1030
    %1530 = vmatpush1.bf16.msra.mxu0 %v1029
    %1531 = vmatprep.subr.bf16.mxu0 %v1034
    %1532 = vmatpush1.bf16.msra.mxu0 %v1033
    %1533 = vmatprep.subr.bf16.mxu0 %v1038
    %1534 = vmatpush1.bf16.msra.mxu0 %v1037
    %1535 = vmatprep.subr.bf16.mxu0 %v1042
    %1536 = vmatpush1.bf16.msra.mxu0 %v1041
    %1537 = vmatprep.subr.bf16.mxu0 %v1046
    %1538 = vmatpush1.bf16.msra.mxu0 %v1045
    %1539 = vmatprep.subr.bf16.mxu0 %v1050
    %1540 = vmatpush1.bf16.msra.mxu0 %v1049
    %1541 = vmatprep.subr.bf16.mxu0 %v1054
    %1542 = vmatpush1.bf16.msra.mxu0 %v1053
    %1543 = vmatprep.subr.bf16.mxu0 %v1058
    %1544 = vmatpush1.bf16.msra.mxu0 %v1057
    %1545 = vmatprep.subr.bf16.mxu0 %v1062
    %1546 = vmatpush1.bf16.msra.mxu0 %v1061
    %1547 = vmatprep.subr.bf16.mxu0 %v1066
    %1548 = vmatpush1.bf16.msra.mxu0 %v1065
    %1549 = vmatprep.mubr.bf16.mxu0 %v67
    %1550 = vmatmul.mubr.bf16.gmra.mrb[0].mxu0 %v66
    %v1551 = vpop.f32.mrb[0].mxu0
    %v1552 = vadd.f32 %v1511, %v1551
    %v1553 = vpop.f32.mrb[0].mxu0
    %v1554 = vadd.f32 %v1513, %v1553
    %v1555 = vpop.f32.mrb[0].mxu0
    %v1556 = vpop.f32.mrb[0].mxu0
    %1557 = vdwg.mxu0
    %1558 = vmatprep.subr.bf16.mxu0 %v1070
    %1559 = vmatpush1.bf16.msra.mxu0 %v1069
    %1560 = vmatprep.subr.bf16.mxu0 0
    %1561 = vmatpush1.bf16.msra.mxu0 0
    %1562 = vmatprep.subr.bf16.mxu0 0
    %1563 = vmatpush1.bf16.msra.mxu0 0
    %1564 = vmatprep.subr.bf16.mxu0 0
    %1565 = vmatpush1.bf16.msra.mxu0 0
    %1566 = vmatprep.subr.bf16.mxu0 0
    %1567 = vmatpush1.bf16.msra.mxu0 0
    %1568 = vmatprep.subr.bf16.mxu0 0
    %1569 = vmatpush1.bf16.msra.mxu0 0
    %1570 = vmatprep.subr.bf16.mxu0 0
    %1571 = vmatpush1.bf16.msra.mxu0 0
    %1572 = vmatprep.subr.bf16.mxu0 0
    %1573 = vmatpush1.bf16.msra.mxu0 0
    %1574 = vmatprep.subr.bf16.mxu0 0
    %1575 = vmatpush1.bf16.msra.mxu0 0
    %1576 = vmatprep.subr.bf16.mxu0 0
    %1577 = vmatpush1.bf16.msra.mxu0 0
    %1578 = vmatprep.subr.bf16.mxu0 0
    %1579 = vmatpush1.bf16.msra.mxu0 0
    %1580 = vmatprep.subr.bf16.mxu0 0
    %1581 = vmatpush1.bf16.msra.mxu0 0
    %1582 = vmatprep.subr.bf16.mxu0 0
    %1583 = vmatpush1.bf16.msra.mxu0 0
    %1584 = vmatprep.subr.bf16.mxu0 0
    %1585 = vmatpush1.bf16.msra.mxu0 0
    %1586 = vmatprep.subr.bf16.mxu0 0
    %1587 = vmatpush1.bf16.msra.mxu0 0
    %1588 = vmatprep.subr.bf16.mxu0 0
    %1589 = vmatpush1.bf16.msra.mxu0 0
    %1590 = vmatprep.mubr.bf16.mxu0 0
    %1591 = vmatmul.mubr.bf16.gmra.mrb[0].mxu0 %v1269
    %v1592 = vpop.f32.mrb[0].mxu0
    %v1593 = vadd.f32 %v1552, %v1592
    %v1594 = vpop.f32.mrb[0].mxu0
    %v1595 = vadd.f32 %v1554, %v1594
    %v1596 = vpop.f32.mrb[0].mxu0
    %v1597 = vpop.f32.mrb[0].mxu0
    %1598 = vdwg.mxu0
    %v1599 = vmax.f32 %v1429, 0.0
    %v1600 = vmax.f32 %v1431, 0.0
    %v1601 = vmax.f32 %v1593, 0.0
    %v1602 = vmax.f32 %v1595, 0.0
    %v1603 = vpack.c.bf16 %v1599, %v1599
    %v1604 = vpack.c.bf16 %v1600, %v1600
    %v1605 = vpack.c.bf16 %v1601, %v1601
    %v1606 = vpack.c.bf16 %v1602, %v1602
    %v1607 = vld [vmem:[#allocation4] sm:$0xff]
    %v1608 = vld [vmem:[#allocation4 + $0x8] sm:$0xff]
    %v1609 = vld [vmem:[#allocation4 + $0x10] sm:$0xff]
    %v1610 = vld [vmem:[#allocation4 + $0x18] sm:$0xff]
    %v1611 = vld [vmem:[#allocation4 + $0x20] sm:$0xff]
    %v1612 = vld [vmem:[#allocation4 + $0x28] sm:$0xff]
    %v1613 = vld [vmem:[#allocation4 + $0x30] sm:$0xff]
    %v1614 = vld [vmem:[#allocation4 + $0x38] sm:$0xff]
    %v1615 = vld [vmem:[#allocation4 + $0x40] sm:$0xff]
    %v1616 = vld [vmem:[#allocation4 + $0x48] sm:$0xff]
    %v1617 = vld [vmem:[#allocation4 + $0x50] sm:$0xff]
    %v1618 = vld [vmem:[#allocation4 + $0x58] sm:$0xff]
    %v1619 = vld [vmem:[#allocation4 + $0x60] sm:$0xff]
    %v1620 = vld [vmem:[#allocation4 + $0x68] sm:$0xff]
    %v1621 = vld [vmem:[#allocation4 + $0x70] sm:$0xff]
    %v1622 = vld [vmem:[#allocation4 + $0x78] sm:$0xff]
    %v1623 = vld [vmem:[#allocation4 + $0x80] sm:$0xff]
    %v1624 = vld [vmem:[#allocation4 + $0x88] sm:$0xff]
    %v1625 = vld [vmem:[#allocation4 + $0x90] sm:$0xff]
    %v1626 = vld [vmem:[#allocation4 + $0x98] sm:$0xff]
    %v1627 = vld [vmem:[#allocation4 + $0xa0] sm:$0xff]
    %v1628 = vld [vmem:[#allocation4 + $0xa8] sm:$0xff]
    %v1629 = vld [vmem:[#allocation4 + $0xb0] sm:$0xff]
    %v1630 = vld [vmem:[#allocation4 + $0xb8] sm:$0xff]
    %v1631 = vld [vmem:[#allocation4 + $0xc0] sm:$0xff]
    %v1632 = vld [vmem:[#allocation4 + $0xc8] sm:$0xff]
    %v1633 = vld [vmem:[#allocation4 + $0xd0] sm:$0xff]
    %v1634 = vld [vmem:[#allocation4 + $0xd8] sm:$0xff]
    %v1635 = vld [vmem:[#allocation4 + $0xe0] sm:$0xff]
    %v1636 = vld [vmem:[#allocation4 + $0xe8] sm:$0xff]
    %v1637 = vld [vmem:[#allocation4 + $0xf0] sm:$0xff]
    %v1638 = vld [vmem:[#allocation4 + $0xf8] sm:$0xff]
    %v1639 = vld [vmem:[#allocation4 + $0x100] sm:$0xff]
    %v1640 = vld [vmem:[#allocation4 + $0x108] sm:$0xff]
    %v1641 = vld [vmem:[#allocation4 + $0x110] sm:$0xff]
    %v1642 = vld [vmem:[#allocation4 + $0x118] sm:$0xff]
    %v1643 = vld [vmem:[#allocation4 + $0x120] sm:$0xff]
    %v1644 = vld [vmem:[#allocation4 + $0x128] sm:$0xff]
    %v1645 = vld [vmem:[#allocation4 + $0x130] sm:$0xff]
    %v1646 = vld [vmem:[#allocation4 + $0x138] sm:$0xff]
    %v1647 = vld [vmem:[#allocation4 + $0x140] sm:$0xff]
    %v1648 = vld [vmem:[#allocation4 + $0x148] sm:$0xff]
    %v1649 = vld [vmem:[#allocation4 + $0x150] sm:$0xff]
    %v1650 = vld [vmem:[#allocation4 + $0x158] sm:$0xff]
    %v1651 = vld [vmem:[#allocation4 + $0x160] sm:$0xff]
    %v1652 = vld [vmem:[#allocation4 + $0x168] sm:$0xff]
    %v1653 = vld [vmem:[#allocation4 + $0x170] sm:$0xff]
    %v1654 = vld [vmem:[#allocation4 + $0x178] sm:$0xff]
    %v1655 = vld [vmem:[#allocation4 + $0x180] sm:$0xff]
    %v1656 = vld [vmem:[#allocation4 + $0x188] sm:$0xff]
    %v1657 = vld [vmem:[#allocation4 + $0x190] sm:$0xff]
    %v1658 = vld [vmem:[#allocation4 + $0x198] sm:$0xff]
    %v1659 = vld [vmem:[#allocation4 + $0x1a0] sm:$0xff]
    %v1660 = vld [vmem:[#allocation4 + $0x1a8] sm:$0xff]
    %v1661 = vld [vmem:[#allocation4 + $0x1b0] sm:$0xff]
    %v1662 = vld [vmem:[#allocation4 + $0x1b8] sm:$0xff]
    %v1663 = vld [vmem:[#allocation4 + $0x1c0] sm:$0xff]
    %v1664 = vld [vmem:[#allocation4 + $0x1c8] sm:$0xff]
    %v1665 = vld [vmem:[#allocation4 + $0x1d0] sm:$0xff]
    %v1666 = vld [vmem:[#allocation4 + $0x1d8] sm:$0xff]
    %v1667 = vld [vmem:[#allocation4 + $0x1e0] sm:$0xff]
    %v1668 = vld [vmem:[#allocation4 + $0x1e8] sm:$0xff]
    %v1669 = vld [vmem:[#allocation4 + $0x1f0] sm:$0xff]
    %v1670 = vld [vmem:[#allocation4 + $0x1f8] sm:$0xff]
    %v1671 = vld [vmem:[#allocation4 + $0x200] sm:$0xff]
    %v1672 = vld [vmem:[#allocation4 + $0x208] sm:$0xff]
    %v1673 = vld [vmem:[#allocation4 + $0x210] sm:$0xff]
    %v1674 = vld [vmem:[#allocation4 + $0x218] sm:$0xff]
    %v1675 = vld [vmem:[#allocation4 + $0x220] sm:$0xff]
    %v1676 = vld [vmem:[#allocation4 + $0x228] sm:$0xff]
    %v1677 = vld [vmem:[#allocation4 + $0x230] sm:$0xff]
    %v1678 = vld [vmem:[#allocation4 + $0x238] sm:$0xff]
    %v1679 = vld [vmem:[#allocation4 + $0x240] sm:$0xff]
    %v1680 = vld [vmem:[#allocation4 + $0x248] sm:$0xff]
    %v1681 = vld [vmem:[#allocation4 + $0x250] sm:$0xff]
    %v1682 = vld [vmem:[#allocation4 + $0x258] sm:$0xff]
    %v1683 = vld [vmem:[#allocation4 + $0x260] sm:$0xff]
    %v1684 = vld [vmem:[#allocation4 + $0x268] sm:$0xff]
    %v1685 = vld [vmem:[#allocation4 + $0x270] sm:$0xff]
    %v1686 = vld [vmem:[#allocation4 + $0x278] sm:$0xff]
    %v1687 = vld [vmem:[#allocation4 + $0x280] sm:$0xff]
    %v1688 = vld [vmem:[#allocation4 + $0x288] sm:$0xff]
    %v1689 = vld [vmem:[#allocation4 + $0x290] sm:$0xff]
    %v1690 = vld [vmem:[#allocation4 + $0x298] sm:$0xff]
    %v1691 = vld [vmem:[#allocation4 + $0x2a0] sm:$0xff]
    %v1692 = vld [vmem:[#allocation4 + $0x2a8] sm:$0xff]
    %v1693 = vld [vmem:[#allocation4 + $0x2b0] sm:$0xff]
    %v1694 = vld [vmem:[#allocation4 + $0x2b8] sm:$0xff]
    %v1695 = vld [vmem:[#allocation4 + $0x2c0] sm:$0xff]
    %v1696 = vld [vmem:[#allocation4 + $0x2c8] sm:$0xff]
    %v1697 = vld [vmem:[#allocation4 + $0x2d0] sm:$0xff]
    %v1698 = vld [vmem:[#allocation4 + $0x2d8] sm:$0xff]
    %v1699 = vld [vmem:[#allocation4 + $0x2e0] sm:$0xff]
    %v1700 = vld [vmem:[#allocation4 + $0x2e8] sm:$0xff]
    %v1701 = vld [vmem:[#allocation4 + $0x2f0] sm:$0xff]
    %v1702 = vld [vmem:[#allocation4 + $0x2f8] sm:$0xff]
    %v1703 = vld [vmem:[#allocation4 + $0x300] sm:$0xff]
    %v1704 = vld [vmem:[#allocation4 + $0x308] sm:$0xff]
    %v1705 = vld [vmem:[#allocation4 + $0x310] sm:$0xff]
    %v1706 = vld [vmem:[#allocation4 + $0x318] sm:$0xff]
    %v1707 = vld [vmem:[#allocation4 + $0x320] sm:$0xff]
    %v1708 = vld [vmem:[#allocation4 + $0x328] sm:$0xff]
    %v1709 = vld [vmem:[#allocation4 + $0x330] sm:$0xff]
    %v1710 = vld [vmem:[#allocation4 + $0x338] sm:$0xff]
    %v1711 = vld [vmem:[#allocation4 + $0x340] sm:$0xff]
    %v1712 = vld [vmem:[#allocation4 + $0x348] sm:$0xff]
    %v1713 = vld [vmem:[#allocation4 + $0x350] sm:$0xff]
    %v1714 = vld [vmem:[#allocation4 + $0x358] sm:$0xff]
    %v1715 = vld [vmem:[#allocation4 + $0x360] sm:$0xff]
    %v1716 = vld [vmem:[#allocation4 + $0x368] sm:$0xff]
    %v1717 = vld [vmem:[#allocation4 + $0x370] sm:$0xff]
    %v1718 = vld [vmem:[#allocation4 + $0x378] sm:$0xff]
    %v1719 = vld [vmem:[#allocation4 + $0x380] sm:$0xff]
    %v1720 = vld [vmem:[#allocation4 + $0x388] sm:$0xff]
    %v1721 = vld [vmem:[#allocation4 + $0x390] sm:$0xff]
    %v1722 = vld [vmem:[#allocation4 + $0x398] sm:$0xff]
    %v1723 = vld [vmem:[#allocation4 + $0x3a0] sm:$0xff]
    %v1724 = vld [vmem:[#allocation4 + $0x3a8] sm:$0xff]
    %v1725 = vld [vmem:[#allocation4 + $0x3b0] sm:$0xff]
    %v1726 = vld [vmem:[#allocation4 + $0x3b8] sm:$0xff]
    %v1727 = vld [vmem:[#allocation4 + $0x3c0] sm:$0xff]
    %v1728 = vld [vmem:[#allocation4 + $0x3c8] sm:$0xff]
    %v1729 = vld [vmem:[#allocation4 + $0x3d0] sm:$0xff]
    %v1730 = vld [vmem:[#allocation4 + $0x3d8] sm:$0xff]
    %v1731 = vld [vmem:[#allocation4 + $0x3e0] sm:$0xff]
    %v1732 = vld [vmem:[#allocation4 + $0x3e8] sm:$0xff]
    %v1733 = vld [vmem:[#allocation4 + $0x3f0] sm:$0xff]
    %v1734 = vld [vmem:[#allocation4 + $0x3f8] sm:$0xff]
    %v1735 = vld [vmem:[%s4] sm:$0xf]
    %v1737 = vlaneseq
    %v1738 = vshrl.u32 %v1737, 7
    %v1739 = vsub.s32 0, %v1738
    %v1740 = vrot.slane %v1735, %v1739
    %v1741 = vlaneseq
    %v1742 = vshrl.u32 %v1741, 7
    %v1743 = vsub.s32 1, %v1742
    %v1744 = vrot.slane %v1735, %v1743
    %v1745 = vlaneseq
    %v1746 = vshrl.u32 %v1745, 7
    %v1747 = vsub.s32 2, %v1746
    %v1748 = vrot.slane %v1735, %v1747
    %v1749 = vlaneseq
    %v1750 = vshrl.u32 %v1749, 7
    %v1751 = vsub.s32 3, %v1750
    %v1752 = vrot.slane %v1735, %v1751
    %v1885 = vunpack.c.l.b16 %v1607
    %v1886 = vunpack.c.h.b16 %v1607
    %v1887 = vunpack.c.l.b16 %v1608
    %v1888 = vunpack.c.h.b16 %v1608
    %v1889 = vunpack.c.l.b16 %v1609
    %v1890 = vunpack.c.h.b16 %v1609
    %v1891 = vunpack.c.l.b16 %v1610
    %v1892 = vunpack.c.h.b16 %v1610
    %v1893 = vunpack.c.l.b16 %v1611
    %v1894 = vunpack.c.h.b16 %v1611
    %v1895 = vunpack.c.l.b16 %v1612
    %v1896 = vunpack.c.h.b16 %v1612
    %v1897 = vunpack.c.l.b16 %v1613
    %v1898 = vunpack.c.h.b16 %v1613
    %v1899 = vunpack.c.l.b16 %v1614
    %v1900 = vunpack.c.h.b16 %v1614
    %v1901 = vunpack.c.l.b16 %v1615
    %v1902 = vunpack.c.h.b16 %v1615
    %v1903 = vunpack.c.l.b16 %v1616
    %v1904 = vunpack.c.h.b16 %v1616
    %v1905 = vunpack.c.l.b16 %v1617
    %v1906 = vunpack.c.h.b16 %v1617
    %v1907 = vunpack.c.l.b16 %v1618
    %v1908 = vunpack.c.h.b16 %v1618
    %v1909 = vunpack.c.l.b16 %v1619
    %v1910 = vunpack.c.h.b16 %v1619
    %v1911 = vunpack.c.l.b16 %v1620
    %v1912 = vunpack.c.h.b16 %v1620
    %v1913 = vunpack.c.l.b16 %v1621
    %v1914 = vunpack.c.h.b16 %v1621
    %v1915 = vunpack.c.l.b16 %v1622
    %v1916 = vunpack.c.h.b16 %v1622
    %v1917 = vunpack.c.l.b16 %v1623
    %v1918 = vunpack.c.h.b16 %v1623
    %v1919 = vunpack.c.l.b16 %v1624
    %v1920 = vunpack.c.h.b16 %v1624
    %v1921 = vunpack.c.l.b16 %v1625
    %v1922 = vunpack.c.h.b16 %v1625
    %v1923 = vunpack.c.l.b16 %v1626
    %v1924 = vunpack.c.h.b16 %v1626
    %v1925 = vunpack.c.l.b16 %v1627
    %v1926 = vunpack.c.h.b16 %v1627
    %v1927 = vunpack.c.l.b16 %v1628
    %v1928 = vunpack.c.h.b16 %v1628
    %v1929 = vunpack.c.l.b16 %v1629
    %v1930 = vunpack.c.h.b16 %v1629
    %v1931 = vunpack.c.l.b16 %v1630
    %v1932 = vunpack.c.h.b16 %v1630
    %v1933 = vunpack.c.l.b16 %v1631
    %v1934 = vunpack.c.h.b16 %v1631
    %v1935 = vunpack.c.l.b16 %v1632
    %v1936 = vunpack.c.h.b16 %v1632
    %v1937 = vunpack.c.l.b16 %v1633
    %v1938 = vunpack.c.h.b16 %v1633
    %v1939 = vunpack.c.l.b16 %v1634
    %v1940 = vunpack.c.h.b16 %v1634
    %v1941 = vunpack.c.l.b16 %v1635
    %v1942 = vunpack.c.h.b16 %v1635
    %v1943 = vunpack.c.l.b16 %v1636
    %v1944 = vunpack.c.h.b16 %v1636
    %v1945 = vunpack.c.l.b16 %v1637
    %v1946 = vunpack.c.h.b16 %v1637
    %v1947 = vunpack.c.l.b16 %v1638
    %v1948 = vunpack.c.h.b16 %v1638
    %v1949 = vunpack.c.l.b16 %v1639
    %v1950 = vunpack.c.h.b16 %v1639
    %v1951 = vunpack.c.l.b16 %v1640
    %v1952 = vunpack.c.h.b16 %v1640
    %v1953 = vunpack.c.l.b16 %v1641
    %v1954 = vunpack.c.h.b16 %v1641
    %v1955 = vunpack.c.l.b16 %v1642
    %v1956 = vunpack.c.h.b16 %v1642
    %v1957 = vunpack.c.l.b16 %v1643
    %v1958 = vunpack.c.h.b16 %v1643
    %v1959 = vunpack.c.l.b16 %v1644
    %v1960 = vunpack.c.h.b16 %v1644
    %v1961 = vunpack.c.l.b16 %v1645
    %v1962 = vunpack.c.h.b16 %v1645
    %v1963 = vunpack.c.l.b16 %v1646
    %v1964 = vunpack.c.h.b16 %v1646
    %v1965 = vunpack.c.l.b16 %v1647
    %v1966 = vunpack.c.h.b16 %v1647
    %v1967 = vunpack.c.l.b16 %v1648
    %v1968 = vunpack.c.h.b16 %v1648
    %v1969 = vunpack.c.l.b16 %v1649
    %v1970 = vunpack.c.h.b16 %v1649
    %v1971 = vunpack.c.l.b16 %v1650
    %v1972 = vunpack.c.h.b16 %v1650
    %v1973 = vunpack.c.l.b16 %v1651
    %v1974 = vunpack.c.h.b16 %v1651
    %v1975 = vunpack.c.l.b16 %v1652
    %v1976 = vunpack.c.h.b16 %v1652
    %v1977 = vunpack.c.l.b16 %v1653
    %v1978 = vunpack.c.h.b16 %v1653
    %v1979 = vunpack.c.l.b16 %v1654
    %v1980 = vunpack.c.h.b16 %v1654
    %v1981 = vunpack.c.l.b16 %v1655
    %v1982 = vunpack.c.h.b16 %v1655
    %v1983 = vunpack.c.l.b16 %v1656
    %v1984 = vunpack.c.h.b16 %v1656
    %v1985 = vunpack.c.l.b16 %v1657
    %v1986 = vunpack.c.h.b16 %v1657
    %v1987 = vunpack.c.l.b16 %v1658
    %v1988 = vunpack.c.h.b16 %v1658
    %v1989 = vunpack.c.l.b16 %v1659
    %v1990 = vunpack.c.h.b16 %v1659
    %v1991 = vunpack.c.l.b16 %v1660
    %v1992 = vunpack.c.h.b16 %v1660
    %v1993 = vunpack.c.l.b16 %v1661
    %v1994 = vunpack.c.h.b16 %v1661
    %v1995 = vunpack.c.l.b16 %v1662
    %v1996 = vunpack.c.h.b16 %v1662
    %v1997 = vunpack.c.l.b16 %v1663
    %v1998 = vunpack.c.h.b16 %v1663
    %v1999 = vunpack.c.l.b16 %v1664
    %v2000 = vunpack.c.h.b16 %v1664
    %v2001 = vunpack.c.l.b16 %v1665
    %v2002 = vunpack.c.h.b16 %v1665
    %v2003 = vunpack.c.l.b16 %v1666
    %v2004 = vunpack.c.h.b16 %v1666
    %v2005 = vunpack.c.l.b16 %v1667
    %v2006 = vunpack.c.h.b16 %v1667
    %v2007 = vunpack.c.l.b16 %v1668
    %v2008 = vunpack.c.h.b16 %v1668
    %v2009 = vunpack.c.l.b16 %v1669
    %v2010 = vunpack.c.h.b16 %v1669
    %v2011 = vunpack.c.l.b16 %v1670
    %v2012 = vunpack.c.h.b16 %v1670
    %v2013 = vunpack.c.l.b16 %v1671
    %v2014 = vunpack.c.h.b16 %v1671
    %v2015 = vunpack.c.l.b16 %v1672
    %v2016 = vunpack.c.h.b16 %v1672
    %v2017 = vunpack.c.l.b16 %v1673
    %v2018 = vunpack.c.h.b16 %v1673
    %v2019 = vunpack.c.l.b16 %v1674
    %v2020 = vunpack.c.h.b16 %v1674
    %v2021 = vunpack.c.l.b16 %v1675
    %v2022 = vunpack.c.h.b16 %v1675
    %v2023 = vunpack.c.l.b16 %v1676
    %v2024 = vunpack.c.h.b16 %v1676
    %v2025 = vunpack.c.l.b16 %v1677
    %v2026 = vunpack.c.h.b16 %v1677
    %v2027 = vunpack.c.l.b16 %v1678
    %v2028 = vunpack.c.h.b16 %v1678
    %v2029 = vunpack.c.l.b16 %v1679
    %v2030 = vunpack.c.h.b16 %v1679
    %v2031 = vunpack.c.l.b16 %v1680
    %v2032 = vunpack.c.h.b16 %v1680
    %v2033 = vunpack.c.l.b16 %v1681
    %v2034 = vunpack.c.h.b16 %v1681
    %v2035 = vunpack.c.l.b16 %v1682
    %v2036 = vunpack.c.h.b16 %v1682
    %v2037 = vunpack.c.l.b16 %v1683
    %v2038 = vunpack.c.h.b16 %v1683
    %v2039 = vunpack.c.l.b16 %v1684
    %v2040 = vunpack.c.h.b16 %v1684
    %v2041 = vunpack.c.l.b16 %v1685
    %v2042 = vunpack.c.h.b16 %v1685
    %v2043 = vunpack.c.l.b16 %v1686
    %v2044 = vunpack.c.h.b16 %v1686
    %v2045 = vunpack.c.l.b16 %v1687
    %v2046 = vunpack.c.h.b16 %v1687
    %v2047 = vunpack.c.l.b16 %v1688
    %v2048 = vunpack.c.h.b16 %v1688
    %v2049 = vunpack.c.l.b16 %v1689
    %v2050 = vunpack.c.h.b16 %v1689
    %v2051 = vunpack.c.l.b16 %v1690
    %v2052 = vunpack.c.h.b16 %v1690
    %v2053 = vunpack.c.l.b16 %v1691
    %v2054 = vunpack.c.h.b16 %v1691
    %v2055 = vunpack.c.l.b16 %v1692
    %v2056 = vunpack.c.h.b16 %v1692
    %v2057 = vunpack.c.l.b16 %v1693
    %v2058 = vunpack.c.h.b16 %v1693
    %v2059 = vunpack.c.l.b16 %v1694
    %v2060 = vunpack.c.h.b16 %v1694
    %v2061 = vunpack.c.l.b16 %v1695
    %v2062 = vunpack.c.h.b16 %v1695
    %v2063 = vunpack.c.l.b16 %v1696
    %v2064 = vunpack.c.h.b16 %v1696
    %v2065 = vunpack.c.l.b16 %v1697
    %v2066 = vunpack.c.h.b16 %v1697
    %v2067 = vunpack.c.l.b16 %v1698
    %v2068 = vunpack.c.h.b16 %v1698
    %v2069 = vunpack.c.l.b16 %v1699
    %v2070 = vunpack.c.h.b16 %v1699
    %v2071 = vunpack.c.l.b16 %v1700
    %v2072 = vunpack.c.h.b16 %v1700
    %v2073 = vunpack.c.l.b16 %v1701
    %v2074 = vunpack.c.h.b16 %v1701
    %v2075 = vunpack.c.l.b16 %v1702
    %v2076 = vunpack.c.h.b16 %v1702
    %v2077 = vunpack.c.l.b16 %v1703
    %v2078 = vunpack.c.h.b16 %v1703
    %v2079 = vunpack.c.l.b16 %v1704
    %v2080 = vunpack.c.h.b16 %v1704
    %v2081 = vunpack.c.l.b16 %v1705
    %v2082 = vunpack.c.h.b16 %v1705
    %v2083 = vunpack.c.l.b16 %v1706
    %v2084 = vunpack.c.h.b16 %v1706
    %v2085 = vunpack.c.l.b16 %v1707
    %v2086 = vunpack.c.h.b16 %v1707
    %v2087 = vunpack.c.l.b16 %v1708
    %v2088 = vunpack.c.h.b16 %v1708
    %v2089 = vunpack.c.l.b16 %v1709
    %v2090 = vunpack.c.h.b16 %v1709
    %v2091 = vunpack.c.l.b16 %v1710
    %v2092 = vunpack.c.h.b16 %v1710
    %v2093 = vunpack.c.l.b16 %v1711
    %v2094 = vunpack.c.h.b16 %v1711
    %v2095 = vunpack.c.l.b16 %v1712
    %v2096 = vunpack.c.h.b16 %v1712
    %v2097 = vunpack.c.l.b16 %v1713
    %v2098 = vunpack.c.h.b16 %v1713
    %v2099 = vunpack.c.l.b16 %v1714
    %v2100 = vunpack.c.h.b16 %v1714
    %v2101 = vunpack.c.l.b16 %v1715
    %v2102 = vunpack.c.h.b16 %v1715
    %v2103 = vunpack.c.l.b16 %v1716
    %v2104 = vunpack.c.h.b16 %v1716
    %v2105 = vunpack.c.l.b16 %v1717
    %v2106 = vunpack.c.h.b16 %v1717
    %v2107 = vunpack.c.l.b16 %v1718
    %v2108 = vunpack.c.h.b16 %v1718
    %v2109 = vunpack.c.l.b16 %v1719
    %v2110 = vunpack.c.h.b16 %v1719
    %v2111 = vunpack.c.l.b16 %v1720
    %v2112 = vunpack.c.h.b16 %v1720
    %v2113 = vunpack.c.l.b16 %v1721
    %v2114 = vunpack.c.h.b16 %v1721
    %v2115 = vunpack.c.l.b16 %v1722
    %v2116 = vunpack.c.h.b16 %v1722
    %v2117 = vunpack.c.l.b16 %v1723
    %v2118 = vunpack.c.h.b16 %v1723
    %v2119 = vunpack.c.l.b16 %v1724
    %v2120 = vunpack.c.h.b16 %v1724
    %v2121 = vunpack.c.l.b16 %v1725
    %v2122 = vunpack.c.h.b16 %v1725
    %v2123 = vunpack.c.l.b16 %v1726
    %v2124 = vunpack.c.h.b16 %v1726
    %v2125 = vunpack.c.l.b16 %v1727
    %v2126 = vunpack.c.h.b16 %v1727
    %v2127 = vunpack.c.l.b16 %v1728
    %v2128 = vunpack.c.h.b16 %v1728
    %v2129 = vunpack.c.l.b16 %v1729
    %v2130 = vunpack.c.h.b16 %v1729
    %v2131 = vunpack.c.l.b16 %v1730
    %v2132 = vunpack.c.h.b16 %v1730
    %v2133 = vunpack.c.l.b16 %v1731
    %v2134 = vunpack.c.h.b16 %v1731
    %v2135 = vunpack.c.l.b16 %v1732
    %v2136 = vunpack.c.h.b16 %v1732
    %v2137 = vunpack.c.l.b16 %v1733
    %v2138 = vunpack.c.h.b16 %v1733
    %v2139 = vunpack.c.l.b16 %v1734
    %v2140 = vunpack.c.h.b16 %v1734
    %v2141 = vpack.c.b16 %v1889, %v1885
    %v2142 = vpack.c.b16 %v1890, %v1886
    %v2143 = vpack.c.b16 %v1891, %v1887
    %v2144 = vpack.c.b16 %v1892, %v1888
    %v2145 = vpack.c.b16 %v1897, %v1893
    %v2146 = vpack.c.b16 %v1898, %v1894
    %v2147 = vpack.c.b16 %v1899, %v1895
    %v2148 = vpack.c.b16 %v1900, %v1896
    %v2149 = vpack.c.b16 %v1905, %v1901
    %v2150 = vpack.c.b16 %v1906, %v1902
    %v2151 = vpack.c.b16 %v1907, %v1903
    %v2152 = vpack.c.b16 %v1908, %v1904
    %v2153 = vpack.c.b16 %v1913, %v1909
    %v2154 = vpack.c.b16 %v1914, %v1910
    %v2155 = vpack.c.b16 %v1915, %v1911
    %v2156 = vpack.c.b16 %v1916, %v1912
    %v2157 = vpack.c.b16 %v1921, %v1917
    %v2158 = vpack.c.b16 %v1922, %v1918
    %v2159 = vpack.c.b16 %v1923, %v1919
    %v2160 = vpack.c.b16 %v1924, %v1920
    %v2161 = vpack.c.b16 %v1929, %v1925
    %v2162 = vpack.c.b16 %v1930, %v1926
    %v2163 = vpack.c.b16 %v1931, %v1927
    %v2164 = vpack.c.b16 %v1932, %v1928
    %v2165 = vpack.c.b16 %v1937, %v1933
    %v2166 = vpack.c.b16 %v1938, %v1934
    %v2167 = vpack.c.b16 %v1939, %v1935
    %v2168 = vpack.c.b16 %v1940, %v1936
    %v2169 = vpack.c.b16 %v1945, %v1941
    %v2170 = vpack.c.b16 %v1946, %v1942
    %v2171 = vpack.c.b16 %v1947, %v1943
    %v2172 = vpack.c.b16 %v1948, %v1944
    %v2173 = vpack.c.b16 %v1953, %v1949
    %v2174 = vpack.c.b16 %v1954, %v1950
    %v2175 = vpack.c.b16 %v1955, %v1951
    %v2176 = vpack.c.b16 %v1956, %v1952
    %v2177 = vpack.c.b16 %v1961, %v1957
    %v2178 = vpack.c.b16 %v1962, %v1958
    %v2179 = vpack.c.b16 %v1963, %v1959
    %v2180 = vpack.c.b16 %v1964, %v1960
    %v2181 = vpack.c.b16 %v1969, %v1965
    %v2182 = vpack.c.b16 %v1970, %v1966
    %v2183 = vpack.c.b16 %v1971, %v1967
    %v2184 = vpack.c.b16 %v1972, %v1968
    %v2185 = vpack.c.b16 %v1977, %v1973
    %v2186 = vpack.c.b16 %v1978, %v1974
    %v2187 = vpack.c.b16 %v1979, %v1975
    %v2188 = vpack.c.b16 %v1980, %v1976
    %v2189 = vpack.c.b16 %v1985, %v1981
    %v2190 = vpack.c.b16 %v1986, %v1982
    %v2191 = vpack.c.b16 %v1987, %v1983
    %v2192 = vpack.c.b16 %v1988, %v1984
    %v2193 = vpack.c.b16 %v1993, %v1989
    %v2194 = vpack.c.b16 %v1994, %v1990
    %v2195 = vpack.c.b16 %v1995, %v1991
    %v2196 = vpack.c.b16 %v1996, %v1992
    %v2197 = vpack.c.b16 %v2001, %v1997
    %v2198 = vpack.c.b16 %v2002, %v1998
    %v2199 = vpack.c.b16 %v2003, %v1999
    %v2200 = vpack.c.b16 %v2004, %v2000
    %v2201 = vpack.c.b16 %v2009, %v2005
    %v2202 = vpack.c.b16 %v2010, %v2006
    %v2203 = vpack.c.b16 %v2011, %v2007
    %v2204 = vpack.c.b16 %v2012, %v2008
    %v2205 = vpack.c.b16 %v2017, %v2013
    %v2206 = vpack.c.b16 %v2018, %v2014
    %v2207 = vpack.c.b16 %v2019, %v2015
    %v2208 = vpack.c.b16 %v2020, %v2016
    %v2209 = vpack.c.b16 %v2025, %v2021
    %v2210 = vpack.c.b16 %v2026, %v2022
    %v2211 = vpack.c.b16 %v2027, %v2023
    %v2212 = vpack.c.b16 %v2028, %v2024
    %v2213 = vpack.c.b16 %v2033, %v2029
    %v2214 = vpack.c.b16 %v2034, %v2030
    %v2215 = vpack.c.b16 %v2035, %v2031
    %v2216 = vpack.c.b16 %v2036, %v2032
    %v2217 = vpack.c.b16 %v2041, %v2037
    %v2218 = vpack.c.b16 %v2042, %v2038
    %v2219 = vpack.c.b16 %v2043, %v2039
    %v2220 = vpack.c.b16 %v2044, %v2040
    %v2221 = vpack.c.b16 %v2049, %v2045
    %v2222 = vpack.c.b16 %v2050, %v2046
    %v2223 = vpack.c.b16 %v2051, %v2047
    %v2224 = vpack.c.b16 %v2052, %v2048
    %v2225 = vpack.c.b16 %v2057, %v2053
    %v2226 = vpack.c.b16 %v2058, %v2054
    %v2227 = vpack.c.b16 %v2059, %v2055
    %v2228 = vpack.c.b16 %v2060, %v2056
    %v2229 = vpack.c.b16 %v2065, %v2061
    %v2230 = vpack.c.b16 %v2066, %v2062
    %v2231 = vpack.c.b16 %v2067, %v2063
    %v2232 = vpack.c.b16 %v2068, %v2064
    %v2233 = vpack.c.b16 %v2073, %v2069
    %v2234 = vpack.c.b16 %v2074, %v2070
    %v2235 = vpack.c.b16 %v2075, %v2071
    %v2236 = vpack.c.b16 %v2076, %v2072
    %v2237 = vpack.c.b16 %v2081, %v2077
    %v2238 = vpack.c.b16 %v2082, %v2078
    %v2239 = vpack.c.b16 %v2083, %v2079
    %v2240 = vpack.c.b16 %v2084, %v2080
    %v2241 = vpack.c.b16 %v2089, %v2085
    %v2242 = vpack.c.b16 %v2090, %v2086
    %v2243 = vpack.c.b16 %v2091, %v2087
    %v2244 = vpack.c.b16 %v2092, %v2088
    %v2245 = vpack.c.b16 %v2097, %v2093
    %v2246 = vpack.c.b16 %v2098, %v2094
    %v2247 = vpack.c.b16 %v2099, %v2095
    %v2248 = vpack.c.b16 %v2100, %v2096
    %v2249 = vpack.c.b16 %v2105, %v2101
    %v2250 = vpack.c.b16 %v2106, %v2102
    %v2251 = vpack.c.b16 %v2107, %v2103
    %v2252 = vpack.c.b16 %v2108, %v2104
    %v2253 = vpack.c.b16 %v2113, %v2109
    %v2254 = vpack.c.b16 %v2114, %v2110
    %v2255 = vpack.c.b16 %v2115, %v2111
    %v2256 = vpack.c.b16 %v2116, %v2112
    %v2257 = vpack.c.b16 %v2121, %v2117
    %v2258 = vpack.c.b16 %v2122, %v2118
    %v2259 = vpack.c.b16 %v2123, %v2119
    %v2260 = vpack.c.b16 %v2124, %v2120
    %v2261 = vpack.c.b16 %v2129, %v2125
    %v2262 = vpack.c.b16 %v2130, %v2126
    %v2263 = vpack.c.b16 %v2131, %v2127
    %v2264 = vpack.c.b16 %v2132, %v2128
    %v2265 = vpack.c.b16 %v2137, %v2133
    %v2266 = vpack.c.b16 %v2138, %v2134
    %v2267 = vpack.c.b16 %v2139, %v2135
    %v2268 = vpack.c.b16 %v2140, %v2136
    %2397 = vmatprep.subr.bf16.mxu0 %v2142
    %2398 = vmatpush1.bf16.msra.mxu0 %v2141
    %2399 = vmatprep.subr.bf16.mxu0 %v2146
    %2400 = vmatpush1.bf16.msra.mxu0 %v2145
    %2401 = vmatprep.subr.bf16.mxu0 %v2150
    %2402 = vmatpush1.bf16.msra.mxu0 %v2149
    %2403 = vmatprep.subr.bf16.mxu0 %v2154
    %2404 = vmatpush1.bf16.msra.mxu0 %v2153
    %2405 = vmatprep.subr.bf16.mxu0 %v2158
    %2406 = vmatpush1.bf16.msra.mxu0 %v2157
    %2407 = vmatprep.subr.bf16.mxu0 %v2162
    %2408 = vmatpush1.bf16.msra.mxu0 %v2161
    %2409 = vmatprep.subr.bf16.mxu0 %v2166
    %2410 = vmatpush1.bf16.msra.mxu0 %v2165
    %2411 = vmatprep.subr.bf16.mxu0 %v2170
    %2412 = vmatpush1.bf16.msra.mxu0 %v2169
    %2413 = vmatprep.subr.bf16.mxu0 %v2174
    %2414 = vmatpush1.bf16.msra.mxu0 %v2173
    %2415 = vmatprep.subr.bf16.mxu0 %v2178
    %2416 = vmatpush1.bf16.msra.mxu0 %v2177
    %2417 = vmatprep.subr.bf16.mxu0 %v2182
    %2418 = vmatpush1.bf16.msra.mxu0 %v2181
    %2419 = vmatprep.subr.bf16.mxu0 %v2186
    %2420 = vmatpush1.bf16.msra.mxu0 %v2185
    %2421 = vmatprep.subr.bf16.mxu0 %v2190
    %2422 = vmatpush1.bf16.msra.mxu0 %v2189
    %2423 = vmatprep.subr.bf16.mxu0 %v2194
    %2424 = vmatpush1.bf16.msra.mxu0 %v2193
    %2425 = vmatprep.subr.bf16.mxu0 %v2198
    %2426 = vmatpush1.bf16.msra.mxu0 %v2197
    %2427 = vmatprep.subr.bf16.mxu0 %v2202
    %2428 = vmatpush1.bf16.msra.mxu0 %v2201
    %2429 = vmatprep.mubr.bf16.mxu0 %v1604
    %2430 = vmatmul.mubr.bf16.gmra.mrb[0].mxu0 %v1603
    %v2431 = vpop.f32.mrb[0].mxu0
    %v2432 = vadd.f32 %v1740, %v2431
    %v2433 = vpop.f32.mrb[0].mxu0
    %v2434 = vadd.f32 %v1744, %v2433
    %v2435 = vpop.f32.mrb[0].mxu0
    %v2436 = vpop.f32.mrb[0].mxu0
    %2437 = vdwg.mxu0
    %2438 = vmatprep.subr.bf16.mxu0 %v2206
    %2439 = vmatpush1.bf16.msra.mxu0 %v2205
    %2440 = vmatprep.subr.bf16.mxu0 %v2210
    %2441 = vmatpush1.bf16.msra.mxu0 %v2209
    %2442 = vmatprep.subr.bf16.mxu0 %v2214
    %2443 = vmatpush1.bf16.msra.mxu0 %v2213
    %2444 = vmatprep.subr.bf16.mxu0 %v2218
    %2445 = vmatpush1.bf16.msra.mxu0 %v2217
    %2446 = vmatprep.subr.bf16.mxu0 %v2222
    %2447 = vmatpush1.bf16.msra.mxu0 %v2221
    %2448 = vmatprep.subr.bf16.mxu0 %v2226
    %2449 = vmatpush1.bf16.msra.mxu0 %v2225
    %2450 = vmatprep.subr.bf16.mxu0 %v2230
    %2451 = vmatpush1.bf16.msra.mxu0 %v2229
    %2452 = vmatprep.subr.bf16.mxu0 %v2234
    %2453 = vmatpush1.bf16.msra.mxu0 %v2233
    %2454 = vmatprep.subr.bf16.mxu0 %v2238
    %2455 = vmatpush1.bf16.msra.mxu0 %v2237
    %2456 = vmatprep.subr.bf16.mxu0 %v2242
    %2457 = vmatpush1.bf16.msra.mxu0 %v2241
    %2458 = vmatprep.subr.bf16.mxu0 %v2246
    %2459 = vmatpush1.bf16.msra.mxu0 %v2245
    %2460 = vmatprep.subr.bf16.mxu0 %v2250
    %2461 = vmatpush1.bf16.msra.mxu0 %v2249
    %2462 = vmatprep.subr.bf16.mxu0 %v2254
    %2463 = vmatpush1.bf16.msra.mxu0 %v2253
    %2464 = vmatprep.subr.bf16.mxu0 %v2258
    %2465 = vmatpush1.bf16.msra.mxu0 %v2257
    %2466 = vmatprep.subr.bf16.mxu0 %v2262
    %2467 = vmatpush1.bf16.msra.mxu0 %v2261
    %2468 = vmatprep.subr.bf16.mxu0 %v2266
    %2469 = vmatpush1.bf16.msra.mxu0 %v2265
    %2470 = vmatprep.mubr.bf16.mxu0 %v1606
    %2471 = vmatmul.mubr.bf16.gmra.mrb[0].mxu0 %v1605
    %v2472 = vpop.f32.mrb[0].mxu0
    %v2473 = vadd.f32 %v2432, %v2472
    %v2474 = vpop.f32.mrb[0].mxu0
    %v2475 = vadd.f32 %v2434, %v2474
    %v2476 = vpop.f32.mrb[0].mxu0
    %v2477 = vpop.f32.mrb[0].mxu0
    %2478 = vdwg.mxu0
    %2479 = vmatprep.subr.bf16.mxu0 %v2144
    %2480 = vmatpush1.bf16.msra.mxu0 %v2143
    %2481 = vmatprep.subr.bf16.mxu0 %v2148
    %2482 = vmatpush1.bf16.msra.mxu0 %v2147
    %2483 = vmatprep.subr.bf16.mxu0 %v2152
    %2484 = vmatpush1.bf16.msra.mxu0 %v2151
    %2485 = vmatprep.subr.bf16.mxu0 %v2156
    %2486 = vmatpush1.bf16.msra.mxu0 %v2155
    %2487 = vmatprep.subr.bf16.mxu0 %v2160
    %2488 = vmatpush1.bf16.msra.mxu0 %v2159
    %2489 = vmatprep.subr.bf16.mxu0 %v2164
    %2490 = vmatpush1.bf16.msra.mxu0 %v2163
    %2491 = vmatprep.subr.bf16.mxu0 %v2168
    %2492 = vmatpush1.bf16.msra.mxu0 %v2167
    %2493 = vmatprep.subr.bf16.mxu0 %v2172
    %2494 = vmatpush1.bf16.msra.mxu0 %v2171
    %2495 = vmatprep.subr.bf16.mxu0 %v2176
    %2496 = vmatpush1.bf16.msra.mxu0 %v2175
    %2497 = vmatprep.subr.bf16.mxu0 %v2180
    %2498 = vmatpush1.bf16.msra.mxu0 %v2179
    %2499 = vmatprep.subr.bf16.mxu0 %v2184
    %2500 = vmatpush1.bf16.msra.mxu0 %v2183
    %2501 = vmatprep.subr.bf16.mxu0 %v2188
    %2502 = vmatpush1.bf16.msra.mxu0 %v2187
    %2503 = vmatprep.subr.bf16.mxu0 %v2192
    %2504 = vmatpush1.bf16.msra.mxu0 %v2191
    %2505 = vmatprep.subr.bf16.mxu0 %v2196
    %2506 = vmatpush1.bf16.msra.mxu0 %v2195
    %2507 = vmatprep.subr.bf16.mxu0 %v2200
    %2508 = vmatpush1.bf16.msra.mxu0 %v2199
    %2509 = vmatprep.subr.bf16.mxu0 %v2204
    %2510 = vmatpush1.bf16.msra.mxu0 %v2203
    %2511 = vmatprep.mubr.bf16.mxu0 %v1604
    %2512 = vmatmul.mubr.bf16.gmra.mrb[0].mxu0 %v1603
    %v2513 = vpop.f32.mrb[0].mxu0
    %v2514 = vadd.f32 %v1748, %v2513
    %v2515 = vpop.f32.mrb[0].mxu0
    %v2516 = vadd.f32 %v1752, %v2515
    %v2517 = vpop.f32.mrb[0].mxu0
    %v2518 = vpop.f32.mrb[0].mxu0
    %2519 = vdwg.mxu0
    %2520 = vmatprep.subr.bf16.mxu0 %v2208
    %2521 = vmatpush1.bf16.msra.mxu0 %v2207
    %2522 = vmatprep.subr.bf16.mxu0 %v2212
    %2523 = vmatpush1.bf16.msra.mxu0 %v2211
    %2524 = vmatprep.subr.bf16.mxu0 %v2216
    %2525 = vmatpush1.bf16.msra.mxu0 %v2215
    %2526 = vmatprep.subr.bf16.mxu0 %v2220
    %2527 = vmatpush1.bf16.msra.mxu0 %v2219
    %2528 = vmatprep.subr.bf16.mxu0 %v2224
    %2529 = vmatpush1.bf16.msra.mxu0 %v2223
    %2530 = vmatprep.subr.bf16.mxu0 %v2228
    %2531 = vmatpush1.bf16.msra.mxu0 %v2227
    %2532 = vmatprep.subr.bf16.mxu0 %v2232
    %2533 = vmatpush1.bf16.msra.mxu0 %v2231
    %2534 = vmatprep.subr.bf16.mxu0 %v2236
    %2535 = vmatpush1.bf16.msra.mxu0 %v2235
    %2536 = vmatprep.subr.bf16.mxu0 %v2240
    %2537 = vmatpush1.bf16.msra.mxu0 %v2239
    %2538 = vmatprep.subr.bf16.mxu0 %v2244
    %2539 = vmatpush1.bf16.msra.mxu0 %v2243
    %2540 = vmatprep.subr.bf16.mxu0 %v2248
    %2541 = vmatpush1.bf16.msra.mxu0 %v2247
    %2542 = vmatprep.subr.bf16.mxu0 %v2252
    %2543 = vmatpush1.bf16.msra.mxu0 %v2251
    %2544 = vmatprep.subr.bf16.mxu0 %v2256
    %2545 = vmatpush1.bf16.msra.mxu0 %v2255
    %2546 = vmatprep.subr.bf16.mxu0 %v2260
    %2547 = vmatpush1.bf16.msra.mxu0 %v2259
    %2548 = vmatprep.subr.bf16.mxu0 %v2264
    %2549 = vmatpush1.bf16.msra.mxu0 %v2263
    %2550 = vmatprep.subr.bf16.mxu0 %v2268
    %2551 = vmatpush1.bf16.msra.mxu0 %v2267
    %2552 = vmatprep.mubr.bf16.mxu0 %v1606
    %2553 = vmatmul.mubr.bf16.gmra.mrb[0].mxu0 %v1605
    %v2554 = vpop.f32.mrb[0].mxu0
    %v2555 = vadd.f32 %v2514, %v2554
    %v2556 = vpop.f32.mrb[0].mxu0
    %v2557 = vadd.f32 %v2516, %v2556
    %v2558 = vpop.f32.mrb[0].mxu0
    %v2559 = vpop.f32.mrb[0].mxu0
    %2560 = vdwg.mxu0
    %v2561 = vmax.f32 %v2473, 0.0
    %v2562 = vmax.f32 %v2475, 0.0
    %v2563 = vmax.f32 %v2555, 0.0
    %v2564 = vmax.f32 %v2557, 0.0
    %v2565 = vpack.c.bf16 %v2561, %v2561
    %v2566 = vpack.c.bf16 %v2562, %v2562
    %v2567 = vpack.c.bf16 %v2563, %v2563
    %v2568 = vpack.c.bf16 %v2564, %v2564
    %v2569 = vld [vmem:[%s5] sm:$0xf]
    %v2570 = vld [vmem:[%s5 + $0x4] sm:$0xf]
    %v2571 = vld [vmem:[%s5 + $0x8] sm:$0xf]
    %v2572 = vld [vmem:[%s5 + $0xc] sm:$0xf]
    %v2573 = vld [vmem:[%s5 + $0x10] sm:$0xf]
    %v2574 = vld [vmem:[%s5 + $0x14] sm:$0xf]
    %v2575 = vld [vmem:[%s5 + $0x18] sm:$0xf]
    %v2576 = vld [vmem:[%s5 + $0x1c] sm:$0xf]
    %v2577 = vld [vmem:[%s5 + $0x20] sm:$0xf]
    %v2578 = vld [vmem:[%s5 + $0x24] sm:$0xf]
    %v2579 = vld [vmem:[%s5 + $0x28] sm:$0xf]
    %v2580 = vld [vmem:[%s5 + $0x2c] sm:$0xf]
    %v2581 = vld [vmem:[%s5 + $0x30] sm:$0xf]
    %v2582 = vld [vmem:[%s5 + $0x34] sm:$0xf]
    %v2583 = vld [vmem:[%s5 + $0x38] sm:$0xf]
    %v2584 = vld [vmem:[%s5 + $0x3c] sm:$0xf]
    %v2585 = vld [vmem:[%s5 + $0x40] sm:$0xf]
    %v2586 = vld [vmem:[%s5 + $0x44] sm:$0xf]
    %v2587 = vld [vmem:[%s5 + $0x48] sm:$0xf]
    %v2588 = vld [vmem:[%s5 + $0x4c] sm:$0xf]
    %v2589 = vld [vmem:[%s5 + $0x50] sm:$0xf]
    %v2590 = vld [vmem:[%s5 + $0x54] sm:$0xf]
    %v2591 = vld [vmem:[%s5 + $0x58] sm:$0xf]
    %v2592 = vld [vmem:[%s5 + $0x5c] sm:$0xf]
    %v2593 = vld [vmem:[%s5 + $0x60] sm:$0xf]
    %v2594 = vld [vmem:[%s5 + $0x64] sm:$0xf]
    %v2595 = vld [vmem:[%s5 + $0x68] sm:$0xf]
    %v2596 = vld [vmem:[%s5 + $0x6c] sm:$0xf]
    %v2597 = vld [vmem:[%s5 + $0x70] sm:$0xf]
    %v2598 = vld [vmem:[%s5 + $0x74] sm:$0xf]
    %v2599 = vld [vmem:[%s5 + $0x78] sm:$0xf]
    %v2600 = vld [vmem:[%s5 + $0x7c] sm:$0xf]
    %v2601 = vld [vmem:[%s5 + $0x80] sm:$0xf]
    %v2602 = vld [vmem:[%s5 + $0x84] sm:$0xf]
    %v2603 = vld [vmem:[%s5 + $0x88] sm:$0xf]
    %v2604 = vld [vmem:[%s5 + $0x8c] sm:$0xf]
    %v2605 = vld [vmem:[%s5 + $0x90] sm:$0xf]
    %v2606 = vld [vmem:[%s5 + $0x94] sm:$0xf]
    %v2607 = vld [vmem:[%s5 + $0x98] sm:$0xf]
    %v2608 = vld [vmem:[%s5 + $0x9c] sm:$0xf]
    %v2609 = vld [vmem:[%s5 + $0xa0] sm:$0xf]
    %v2610 = vld [vmem:[%s5 + $0xa4] sm:$0xf]
    %v2611 = vld [vmem:[%s5 + $0xa8] sm:$0xf]
    %v2612 = vld [vmem:[%s5 + $0xac] sm:$0xf]
    %v2613 = vld [vmem:[%s5 + $0xb0] sm:$0xf]
    %v2614 = vld [vmem:[%s5 + $0xb4] sm:$0xf]
    %v2615 = vld [vmem:[%s5 + $0xb8] sm:$0xf]
    %v2616 = vld [vmem:[%s5 + $0xbc] sm:$0xf]
    %v2617 = vld [vmem:[%s5 + $0xc0] sm:$0xf]
    %v2618 = vld [vmem:[%s5 + $0xc4] sm:$0xf]
    %v2619 = vld [vmem:[%s5 + $0xc8] sm:$0xf]
    %v2620 = vld [vmem:[%s5 + $0xcc] sm:$0xf]
    %v2621 = vld [vmem:[%s5 + $0xd0] sm:$0xf]
    %v2622 = vld [vmem:[%s5 + $0xd4] sm:$0xf]
    %v2623 = vld [vmem:[%s5 + $0xd8] sm:$0xf]
    %v2624 = vld [vmem:[%s5 + $0xdc] sm:$0xf]
    %v2625 = vld [vmem:[%s5 + $0xe0] sm:$0xf]
    %v2626 = vld [vmem:[%s5 + $0xe4] sm:$0xf]
    %v2627 = vld [vmem:[%s5 + $0xe8] sm:$0xf]
    %v2628 = vld [vmem:[%s5 + $0xec] sm:$0xf]
    %v2629 = vld [vmem:[%s5 + $0xf0] sm:$0xf]
    %v2630 = vld [vmem:[%s5 + $0xf4] sm:$0xf]
    %v2631 = vld [vmem:[%s5 + $0xf8] sm:$0xf]
    %v2632 = vld [vmem:[%s5 + $0xfc] sm:$0xf]
    %v2633 = vld [vmem:[%s6] sm:$0x1]
    %v2635 = vlaneseq
    %v2636 = vshrl.u32 %v2635, 7
    %v2637 = vsub.s32 0, %v2636
    %v2638 = vrot.slane %v2633, %v2637
    %v2704 = vunpack.c.l.b16 %v2569
    %v2705 = vunpack.c.l.b16 %v2570
    %v2706 = vunpack.c.l.b16 %v2571
    %v2707 = vunpack.c.l.b16 %v2572
    %v2708 = vunpack.c.l.b16 %v2573
    %v2709 = vunpack.c.l.b16 %v2574
    %v2710 = vunpack.c.l.b16 %v2575
    %v2711 = vunpack.c.l.b16 %v2576
    %v2712 = vunpack.c.l.b16 %v2577
    %v2713 = vunpack.c.l.b16 %v2578
    %v2714 = vunpack.c.l.b16 %v2579
    %v2715 = vunpack.c.l.b16 %v2580
    %v2716 = vunpack.c.l.b16 %v2581
    %v2717 = vunpack.c.l.b16 %v2582
    %v2718 = vunpack.c.l.b16 %v2583
    %v2719 = vunpack.c.l.b16 %v2584
    %v2720 = vunpack.c.l.b16 %v2585
    %v2721 = vunpack.c.l.b16 %v2586
    %v2722 = vunpack.c.l.b16 %v2587
    %v2723 = vunpack.c.l.b16 %v2588
    %v2724 = vunpack.c.l.b16 %v2589
    %v2725 = vunpack.c.l.b16 %v2590
    %v2726 = vunpack.c.l.b16 %v2591
    %v2727 = vunpack.c.l.b16 %v2592
    %v2728 = vunpack.c.l.b16 %v2593
    %v2729 = vunpack.c.l.b16 %v2594
    %v2730 = vunpack.c.l.b16 %v2595
    %v2731 = vunpack.c.l.b16 %v2596
    %v2732 = vunpack.c.l.b16 %v2597
    %v2733 = vunpack.c.l.b16 %v2598
    %v2734 = vunpack.c.l.b16 %v2599
    %v2735 = vunpack.c.l.b16 %v2600
    %v2736 = vunpack.c.l.b16 %v2601
    %v2737 = vunpack.c.l.b16 %v2602
    %v2738 = vunpack.c.l.b16 %v2603
    %v2739 = vunpack.c.l.b16 %v2604
    %v2740 = vunpack.c.l.b16 %v2605
    %v2741 = vunpack.c.l.b16 %v2606
    %v2742 = vunpack.c.l.b16 %v2607
    %v2743 = vunpack.c.l.b16 %v2608
    %v2744 = vunpack.c.l.b16 %v2609
    %v2745 = vunpack.c.l.b16 %v2610
    %v2746 = vunpack.c.l.b16 %v2611
    %v2747 = vunpack.c.l.b16 %v2612
    %v2748 = vunpack.c.l.b16 %v2613
    %v2749 = vunpack.c.l.b16 %v2614
    %v2750 = vunpack.c.l.b16 %v2615
    %v2751 = vunpack.c.l.b16 %v2616
    %v2752 = vunpack.c.l.b16 %v2617
    %v2753 = vunpack.c.l.b16 %v2618
    %v2754 = vunpack.c.l.b16 %v2619
    %v2755 = vunpack.c.l.b16 %v2620
    %v2756 = vunpack.c.l.b16 %v2621
    %v2757 = vunpack.c.l.b16 %v2622
    %v2758 = vunpack.c.l.b16 %v2623
    %v2759 = vunpack.c.l.b16 %v2624
    %v2760 = vunpack.c.l.b16 %v2625
    %v2761 = vunpack.c.l.b16 %v2626
    %v2762 = vunpack.c.l.b16 %v2627
    %v2763 = vunpack.c.l.b16 %v2628
    %v2764 = vunpack.c.l.b16 %v2629
    %v2765 = vunpack.c.l.b16 %v2630
    %v2766 = vunpack.c.l.b16 %v2631
    %v2767 = vunpack.c.l.b16 %v2632
    %v2768 = vpack.c.b16 %v2705, %v2704
    %v2769 = vpack.c.b16 %v2707, %v2706
    %v2770 = vpack.c.b16 %v2709, %v2708
    %v2771 = vpack.c.b16 %v2711, %v2710
    %v2772 = vpack.c.b16 %v2713, %v2712
    %v2773 = vpack.c.b16 %v2715, %v2714
    %v2774 = vpack.c.b16 %v2717, %v2716
    %v2775 = vpack.c.b16 %v2719, %v2718
    %v2776 = vpack.c.b16 %v2721, %v2720
    %v2777 = vpack.c.b16 %v2723, %v2722
    %v2778 = vpack.c.b16 %v2725, %v2724
    %v2779 = vpack.c.b16 %v2727, %v2726
    %v2780 = vpack.c.b16 %v2729, %v2728
    %v2781 = vpack.c.b16 %v2731, %v2730
    %v2782 = vpack.c.b16 %v2733, %v2732
    %v2783 = vpack.c.b16 %v2735, %v2734
    %v2784 = vpack.c.b16 %v2737, %v2736
    %v2785 = vpack.c.b16 %v2739, %v2738
    %v2786 = vpack.c.b16 %v2741, %v2740
    %v2787 = vpack.c.b16 %v2743, %v2742
    %v2788 = vpack.c.b16 %v2745, %v2744
    %v2789 = vpack.c.b16 %v2747, %v2746
    %v2790 = vpack.c.b16 %v2749, %v2748
    %v2791 = vpack.c.b16 %v2751, %v2750
    %v2792 = vpack.c.b16 %v2753, %v2752
    %v2793 = vpack.c.b16 %v2755, %v2754
    %v2794 = vpack.c.b16 %v2757, %v2756
    %v2795 = vpack.c.b16 %v2759, %v2758
    %v2796 = vpack.c.b16 %v2761, %v2760
    %v2797 = vpack.c.b16 %v2763, %v2762
    %v2798 = vpack.c.b16 %v2765, %v2764
    %v2799 = vpack.c.b16 %v2767, %v2766
    %2832 = vmatprep.subr.bf16.mxu0 0
    %2833 = vmatpush1.bf16.msra.mxu0 %v2768
    %2834 = vmatprep.subr.bf16.mxu0 0
    %2835 = vmatpush1.bf16.msra.mxu0 %v2769
    %2836 = vmatprep.subr.bf16.mxu0 0
    %2837 = vmatpush1.bf16.msra.mxu0 %v2770
    %2838 = vmatprep.subr.bf16.mxu0 0
    %2839 = vmatpush1.bf16.msra.mxu0 %v2771
    %2840 = vmatprep.subr.bf16.mxu0 0
    %2841 = vmatpush1.bf16.msra.mxu0 %v2772
    %2842 = vmatprep.subr.bf16.mxu0 0
    %2843 = vmatpush1.bf16.msra.mxu0 %v2773
    %2844 = vmatprep.subr.bf16.mxu0 0
    %2845 = vmatpush1.bf16.msra.mxu0 %v2774
    %2846 = vmatprep.subr.bf16.mxu0 0
    %2847 = vmatpush1.bf16.msra.mxu0 %v2775
    %2848 = vmatprep.subr.bf16.mxu0 0
    %2849 = vmatpush1.bf16.msra.mxu0 %v2776
    %2850 = vmatprep.subr.bf16.mxu0 0
    %2851 = vmatpush1.bf16.msra.mxu0 %v2777
    %2852 = vmatprep.subr.bf16.mxu0 0
    %2853 = vmatpush1.bf16.msra.mxu0 %v2778
    %2854 = vmatprep.subr.bf16.mxu0 0
    %2855 = vmatpush1.bf16.msra.mxu0 %v2779
    %2856 = vmatprep.subr.bf16.mxu0 0
    %2857 = vmatpush1.bf16.msra.mxu0 %v2780
    %2858 = vmatprep.subr.bf16.mxu0 0
    %2859 = vmatpush1.bf16.msra.mxu0 %v2781
    %2860 = vmatprep.subr.bf16.mxu0 0
    %2861 = vmatpush1.bf16.msra.mxu0 %v2782
    %2862 = vmatprep.subr.bf16.mxu0 0
    %2863 = vmatpush1.bf16.msra.mxu0 %v2783
    %2864 = vmatprep.mubr.bf16.mxu0 %v2566
    %2865 = vmatmul.mubr.bf16.gmra.mrb[0].mxu0 %v2565
    %v2866 = vpop.f32.mrb[0].mxu0
    %v2867 = vadd.f32 %v2638, %v2866
    %v2868 = vpop.f32.mrb[0].mxu0
    %v2869 = vpop.f32.mrb[0].mxu0
    %v2870 = vpop.f32.mrb[0].mxu0
    %2871 = vdwg.mxu0
    %2872 = vmatprep.subr.bf16.mxu0 0
    %2873 = vmatpush1.bf16.msra.mxu0 %v2784
    %2874 = vmatprep.subr.bf16.mxu0 0
    %2875 = vmatpush1.bf16.msra.mxu0 %v2785
    %2876 = vmatprep.subr.bf16.mxu0 0
    %2877 = vmatpush1.bf16.msra.mxu0 %v2786
    %2878 = vmatprep.subr.bf16.mxu0 0
    %2879 = vmatpush1.bf16.msra.mxu0 %v2787
    %2880 = vmatprep.subr.bf16.mxu0 0
    %2881 = vmatpush1.bf16.msra.mxu0 %v2788
    %2882 = vmatprep.subr.bf16.mxu0 0
    %2883 = vmatpush1.bf16.msra.mxu0 %v2789
    %2884 = vmatprep.subr.bf16.mxu0 0
    %2885 = vmatpush1.bf16.msra.mxu0 %v2790
    %2886 = vmatprep.subr.bf16.mxu0 0
    %2887 = vmatpush1.bf16.msra.mxu0 %v2791
    %2888 = vmatprep.subr.bf16.mxu0 0
    %2889 = vmatpush1.bf16.msra.mxu0 %v2792
    %2890 = vmatprep.subr.bf16.mxu0 0
    %2891 = vmatpush1.bf16.msra.mxu0 %v2793
    %2892 = vmatprep.subr.bf16.mxu0 0
    %2893 = vmatpush1.bf16.msra.mxu0 %v2794
    %2894 = vmatprep.subr.bf16.mxu0 0
    %2895 = vmatpush1.bf16.msra.mxu0 %v2795
    %2896 = vmatprep.subr.bf16.mxu0 0
    %2897 = vmatpush1.bf16.msra.mxu0 %v2796
    %2898 = vmatprep.subr.bf16.mxu0 0
    %2899 = vmatpush1.bf16.msra.mxu0 %v2797
    %2900 = vmatprep.subr.bf16.mxu0 0
    %2901 = vmatpush1.bf16.msra.mxu0 %v2798
    %2902 = vmatprep.subr.bf16.mxu0 0
    %2903 = vmatpush1.bf16.msra.mxu0 %v2799
    %2904 = vmatprep.mubr.bf16.mxu0 %v2568
    %2905 = vmatmul.mubr.bf16.gmra.mrb[0].mxu0 %v2567
    %v2906 = vpop.f32.mrb[0].mxu0
    %v2907 = vadd.f32 %v2867, %v2906
    %v2908 = vpop.f32.mrb[0].mxu0
    %v2909 = vpop.f32.mrb[0].mxu0
    %v2910 = vpop.f32.mrb[0].mxu0
    %2911 = vdwg.mxu0
    %2912 = vst [vmem:[%s7] sm:$0xff] %v2907
    // Predicated region
    $region38: #{neural_network_forward.1} parent=1 // pred_check
      _
    $region39: #{neural_network_forward.1} parent=1 // pred_check_branch
      %2914 = sbr.rel (0) target = $region41
    $region40: #{neural_network_forward.1} parent=1 // pred_region
      _
    $region41: #{neural_network_forward.1} parent=1 // pred_fallthru
      _
    // Predicated region
    $region42: #{neural_network_forward.1} parent=1 // pred_check
      _
    $region43: #{neural_network_forward.1} parent=1 // pred_check_branch
      %2916 = sbr.rel (0) target = $region45
    $region44: #{neural_network_forward.1} parent=1 // pred_region
      _
    $region45: #{neural_network_forward.1} parent=1 // pred_fallthru
      _
    %2917 = vsyncpa [#allocation3], 1
    %2918 = vsyncpa [#allocation5], 1

</llo_original>
